<compile_context>
chip_gen: v5e
topology: v5e:2x2
jax: 0.10.0
libtpu: 0.0.40
codegen_flags: <defaults>
</compile_context>

<pallas_src>
import functools

import jax
import jax.numpy as jnp
import numpy as np
from jax.experimental import pallas as pl
from jax.experimental.pallas import tpu as pltpu

DECAY = 0.25      # LIFNeuron decay
BN_EPS = 1e-5     # nn.BatchNorm2d default eps


def _quant4(mem):
    """SpikeQuantizer.quant4 forward: round(clamp(x, 0, 4))."""
    return jnp.round(jnp.clip(mem, 0.0, 4.0))


def _conv1x1(spike, w):
    """1x1 conv in lane-dense (C, N) layout: (C2, C1) x (C1, N) -> (C2, N)."""
    c1 = spike.shape[0]
    c2 = w.shape[0]
    if min(c1, c2) >= 64:
        # Channels large enough to be worth the MXU.
        return jnp.dot(w, spike, preferred_element_type=jnp.float32)
    # Tiny contraction (default C1=4): the systolic array would be ~idle, so do it
    # as C1 unrolled VPU broadcast-FMAs over the lane (N) axis instead.
    acc = w[:, 0:1] * spike[0:1, :]
    for c in range(1, c1):
        acc = acc + w[:, c:c + 1] * spike[c:c + 1, :]
    return acc


def _lif_stats_kernel(x_ref, stats_ref):
    """Pass 1: LIF recurrence + spike statistics for BatchNorm (no conv, no y store).

    x_ref:     (T, C1, TN)     input rows for this (batch, N-tile)
    stats_ref: (C1, C1 + 1)    column 0: sum_{t,n} s ; columns 1..C1: G = sum s s^T
    """
    T, C1 = x_ref.shape[0], x_ref.shape[1]

    def accumulate(spike, ssum, gram_cols):
        ssum = ssum + jnp.sum(spike, axis=1, keepdims=True)         # XLU lane reduce
        new_cols = []
        for c in range(C1):      # static unroll; G[:, c] += sum_n s_c * s
            prod = spike[c:c + 1, :] * spike                         # (C1, TN) VPU
            new_cols.append(gram_cols[c] + jnp.sum(prod, axis=1, keepdims=True))
        return ssum, tuple(new_cols)
    # TODO(synk): for large C1 this O(C1^2) VPU Gram should switch to an MXU
    # contraction (or to direct conv-output statistics).

    ssum = jnp.zeros((C1, 1), jnp.float32)
    gram_cols = tuple(jnp.zeros((C1, 1), jnp.float32) for _ in range(C1))

    # i == 0: mem = x[0]
    mem = x_ref[0]
    spike = _quant4(mem)
    ssum, gram_cols = accumulate(spike, ssum, gram_cols)

    if T <= 8:
        # Small static trip count: full unroll keeps LLO scheduler visibility.
        for i in range(1, T):
            mem = (mem - spike) * DECAY + x_ref[i]
            spike = _quant4(mem)
            ssum, gram_cols = accumulate(spike, ssum, gram_cols)
    else:
        # Larger T: bound live ranges with a fori_loop carrying (mem, spike, stats).
        def body(i, carry):
            mem, spike, ssum, gram_cols = carry
            mem = (mem - spike) * DECAY + x_ref[i]
            spike = _quant4(mem)
            ssum, gram_cols = accumulate(spike, ssum, gram_cols)
            return mem, spike, ssum, gram_cols

        _, _, ssum, gram_cols = jax.lax.fori_loop(
            1, T, body, (mem, spike, ssum, gram_cols))

    stats_ref[:, 0:1] = ssum
    for c in range(C1):
        stats_ref[:, c + 1:c + 2] = gram_cols[c]


def _lif_conv_bn_kernel(x_ref, w_ref, shift_ref, o_ref):
    """Pass 2: re-run LIF, 1x1 conv with BN-scaled weight, add BN shift, store.

    x_ref:     (T, C1, TN)
    w_ref:     (C2, C1)   conv weight pre-scaled by gamma / sqrt(var + eps)
    shift_ref: (C2, 1)    beta - mean * gamma / sqrt(var + eps)
    o_ref:     (T, C2, TN)
    """
    T = x_ref.shape[0]
    w = w_ref[...]
    shift = shift_ref[...]

    def emit(i, spike):
        o_ref[i] = _conv1x1(spike, w) + shift

    mem = x_ref[0]
    spike = _quant4(mem)
    emit(0, spike)

    if T <= 8:
        for i in range(1, T):
            mem = (mem - spike) * DECAY + x_ref[i]
            spike = _quant4(mem)
            emit(i, spike)
    else:
        def body(i, carry):
            mem, spike = carry
            mem = (mem - spike) * DECAY + x_ref[i]
            spike = _quant4(mem)
            emit(i, spike)
            return mem, spike

        jax.lax.fori_loop(1, T, body, (mem, spike))


def _pick_tile(n, max_rows):
    """Largest multiple of 128 dividing n and <= max_rows (or n itself)."""
    if n <= max_rows or n % 128 != 0:
        return n
    tn = min((max_rows // 128) * 128, n)
    while tn >= 128:
        if n % tn == 0:
            return tn
        tn -= 128
    return n


def spiking_conv_layer(x, conv_w, bn_gamma, bn_beta, *, tile_n=None):
    """x: (T, B, C1, H, W) f32; conv_w: (C2, C1, 1, 1); bn_gamma/bn_beta: (C2,).

    Matches SpikingConvLayer(c1, c2).forward with BatchNorm2d in training mode
    (batch statistics, biased variance over T*B*H*W).
    """
    T, B, C1, H, W = x.shape
    C2 = conv_w.shape[0]
    assert conv_w.shape[2] == 1 and conv_w.shape[3] == 1, "only the default 1x1 conv is supported"
    HW = H * W

    # Free views only -- no relayout.  Channels land on sublanes, H*W on lanes.
    x4 = x.reshape(T, B, C1, HW).astype(jnp.float32)
    w_mat = conv_w.reshape(C2, C1).astype(jnp.float32)

    if tile_n is None:
        # Keep double-buffered (x_tile + o_tile) around <= ~8 MiB so it fits scoped
        # VMEM on every generation (v7x: 64 MiB physical / 32 MiB default scoped).
        bytes_per_lane = 4 * T * (C1 + C2)
        max_rows = max(128, (8 * 1024 * 1024 // (2 * bytes_per_lane)) // 128 * 128)
        tile_n = _pick_tile(HW, max_rows)
    else:
        assert HW % tile_n == 0 and (tile_n % 128 == 0 or tile_n == HW)
    grid_hw = HW // tile_n
    grid = (B, grid_hw)

    # Explicit VMEM limit with headroom (actual use is far below it for auto tiles).
    vmem_need = 4 * 2 * (T * (C1 + C2) * tile_n + C2 * (C1 + 1) + C1 * (C1 + 1))
    vmem_limit = int(min(64 * 1024 * 1024, max(2 * vmem_need, 16 * 1024 * 1024)))
    cparams = pltpu.CompilerParams(
        dimension_semantics=("parallel", "parallel"),   # LIF is only sequential over T (in-body)
        vmem_limit_bytes=vmem_limit)

    x_spec = pl.BlockSpec((T, pl.Squeezed(), C1, tile_n), lambda b, j: (0, b, 0, j))

    # ---- Pass 1: LIF + per-tile spike statistics (sum and Gram matrix) ----
    partial = pl.pallas_call(
        _lif_stats_kernel,
        out_shape=jax.ShapeDtypeStruct((B, grid_hw, C1, C1 + 1), jnp.float32),
        grid=grid,
        in_specs=[x_spec],
        out_specs=pl.BlockSpec((pl.Squeezed(), pl.Squeezed(), C1, C1 + 1),
                               lambda b, j: (b, j, 0, 0)),
        compiler_params=cparams,
    )(x4)

    # ---- Global BatchNorm2d statistics via conv linearity (tiny host-side math) ----
    count = jnp.float32(T * B * HW)
    stats = jnp.sum(partial, axis=(0, 1))                   # (C1, C1+1)
    s_sum = stats[:, 0]                                     # sum_{t,b,h,w} spike     (C1,)
    gram = stats[:, 1:]                                     # sum spike spike^T       (C1, C1)
    mean = (w_mat @ s_sum) / count                          # per-channel E[y]        (C2,)
    e_y2 = jnp.einsum('oc,cd,od->o', w_mat, gram, w_mat) / count
    var = jnp.maximum(e_y2 - mean * mean, 0.0)              # biased (training-mode) variance
    inv = jax.lax.rsqrt(var + BN_EPS)
    gamma = bn_gamma.astype(jnp.float32)
    beta = bn_beta.astype(jnp.float32)
    scale = gamma * inv                                     # (C2,)
    w_scaled = w_mat * scale[:, None]                       # fold BN scale into the conv weight
    shift = (beta - mean * scale).reshape(C2, 1)
    # TODO(synk): eval-mode BatchNorm (running stats) would skip pass 1 and feed the
    # running mean/var here; the running-stat *update* is a training side effect and
    # is not produced by this forward kernel.

    # ---- Pass 2: re-run LIF, conv with BN-scaled weight, add shift, store ----
    out = pl.pallas_call(
        _lif_conv_bn_kernel,
        out_shape=jax.ShapeDtypeStruct((T, B, C2, HW), jnp.float32),
        grid=grid,
        in_specs=[
            x_spec,
            pl.BlockSpec((C2, C1), lambda b, j: (0, 0)),
            pl.BlockSpec((C2, 1), lambda b, j: (0, 0)),
        ],
        out_specs=pl.BlockSpec((T, pl.Squeezed(), C2, tile_n), lambda b, j: (0, b, 0, j)),
        compiler_params=cparams,
    )(x4, w_scaled, shift)
    # TODO(synk): when C1 >= 2*C2 the old store-then-normalize scheme has less HBM
    # traffic than this recompute scheme; select between them on channel shape.

    # s == 1, so H_new == H and W_new == W; this reshape is free.
    return out.reshape(T, B, C2, H, W)


def _reference(x, conv_w, bn_gamma, bn_beta):
    """Pure-JAX reference mirroring the PyTorch forward."""
    T, B, C1, H, W = x.shape
    C2 = conv_w.shape[0]
    # LIFNeuron
    spikes = []
    spike = jnp.zeros_like(x[0])
    mem = None
    for i in range(T):
        mem = x[i] if i == 0 else (mem - spike) * DECAY + x[i]
        spike = jnp.round(jnp.clip(mem, 0.0, 4.0))
        spikes.append(spike)
    s = jnp.stack(spikes, axis=0)                                   # (T,B,C1,H,W)
    # 1x1 conv, no bias
    y = jnp.einsum('tbchw,oc->tbohw', s, conv_w.reshape(C2, C1))
    # BatchNorm2d, training mode (batch stats, biased variance)
    mean = jnp.mean(y, axis=(0, 1, 3, 4), keepdims=True)
    var = jnp.mean((y - mean) ** 2, axis=(0, 1, 3, 4), keepdims=True)
    y = (y - mean) / jnp.sqrt(var + BN_EPS)
    return y * bn_gamma.reshape(1, 1, C2, 1, 1) + bn_beta.reshape(1, 1, C2, 1, 1)


if __name__ == "__main__":
    T, B, C1, H, W = 4, 2, 4, 16, 16     # HW = 256
    C2 = 8

    key = jax.random.PRNGKey(0)
    kx, kw, kg, kb = jax.random.split(key, 4)
    x = jax.random.normal(kx, (T, B, C1, H, W), dtype=jnp.float32) * 2.0
    conv_w = jax.random.normal(kw, (C2, C1, 1, 1), dtype=jnp.float32) * 0.3
    bn_gamma = 1.0 + 0.1 * jax.random.normal(kg, (C2,), dtype=jnp.float32)
    bn_beta = 0.1 * jax.random.normal(kb, (C2,), dtype=jnp.float32)

    # tile_n=128 -> grid (B=2, 2 HW tiles): exercises the pipelined tiling and the
    # cross-tile two-pass BatchNorm.
    fn = jax.jit(functools.partial(spiking_conv_layer, tile_n=128))
    out = jax.block_until_ready(fn(x, conv_w, bn_gamma, bn_beta))

    ref = _reference(x, conv_w, bn_gamma, bn_beta)
    np.testing.assert_allclose(np.asarray(out), np.asarray(ref), rtol=1e-4, atol=5e-4)
    assert out.shape == (T, B, C2, H, W)
    print("KERNEL_OK")
</pallas_src>

<mosaic_0001>
module attributes {stable_mosaic.version = 11 : i64} {
  func.func @_lif_stats_kernel(%arg0: i32, %arg1: i32, %arg2: memref<4x1x4x128xf32, #tpu.memory_space<vmem>>, %arg3: memref<1x1x4x5xf32, #tpu.memory_space<vmem>>) attributes {dimension_semantics = [#tpu.dimension_semantics<parallel>, #tpu.dimension_semantics<parallel>], iteration_bounds = array<i64: 2, 2>, scalar_prefetch = 0 : i64, scratch_operands = 0 : i64, tpu.core_type = #tpu.core_type<tc>, window_params = [{transform_indices = @transform_0, window_bounds = array<i64: 4, 1, 4, 128>}, {transform_indices = @transform_1, window_bounds = array<i64: 1, 1, 4, 5>}]} {
    %cst = arith.constant 0.000000e+00 : f32
    %0 = vector.broadcast %cst : f32 to vector<4x1xf32>
    %cst_0 = arith.constant 0.000000e+00 : f32
    %1 = vector.broadcast %cst_0 : f32 to vector<4x1xf32>
    %cst_1 = arith.constant 0.000000e+00 : f32
    %2 = vector.broadcast %cst_1 : f32 to vector<4x1xf32>
    %cst_2 = arith.constant 0.000000e+00 : f32
    %3 = vector.broadcast %cst_2 : f32 to vector<4x1xf32>
    %cst_3 = arith.constant 0.000000e+00 : f32
    %4 = vector.broadcast %cst_3 : f32 to vector<4x1xf32>
    %c0 = arith.constant 0 : index
    %c0_4 = arith.constant 0 : index
    %c0_5 = arith.constant 0 : index
    %c0_6 = arith.constant 0 : index
    %5 = vector.load %arg2[%c0, %c0_4, %c0_5, %c0_6] : memref<4x1x4x128xf32, #tpu.memory_space<vmem>>, vector<1x1x4x128xf32>
    %6 = vector.shape_cast %5 : vector<1x1x4x128xf32> to vector<4x128xf32>
    %cst_7 = arith.constant 0.000000e+00 : f32
    %cst_8 = arith.constant 4.000000e+00 : f32
    %7 = vector.broadcast %cst_7 : f32 to vector<4x128xf32>
    %8 = arith.maximumf %7, %6 : vector<4x128xf32>
    %9 = vector.broadcast %cst_8 : f32 to vector<4x128xf32>
    %10 = arith.minimumf %9, %8 : vector<4x128xf32>
    %11 = math.roundeven %10 : vector<4x128xf32>
    %cst_9 = arith.constant dense<0.000000e+00> : vector<4xf32>
    %12 = vector.multi_reduction <add>, %11, %cst_9 [1] : vector<4x128xf32> to vector<4xf32>
    %13 = vector.shape_cast %12 : vector<4xf32> to vector<4x1xf32>
    %14 = arith.addf %0, %13 : vector<4x1xf32>
    %15 = vector.extract_strided_slice %11 {offsets = [0, 0], sizes = [1, 128], strides = [1, 1]} : vector<4x128xf32> to vector<1x128xf32>
    %16 = vector.broadcast %15 : vector<1x128xf32> to vector<4x128xf32>
    %17 = arith.mulf %16, %11 : vector<4x128xf32>
    %cst_10 = arith.constant dense<0.000000e+00> : vector<4xf32>
    %18 = vector.multi_reduction <add>, %17, %cst_10 [1] : vector<4x128xf32> to vector<4xf32>
    %19 = vector.shape_cast %18 : vector<4xf32> to vector<4x1xf32>
    %20 = arith.addf %1, %19 : vector<4x1xf32>
    %21 = vector.extract_strided_slice %11 {offsets = [1, 0], sizes = [1, 128], strides = [1, 1]} : vector<4x128xf32> to vector<1x128xf32>
    %22 = vector.broadcast %21 : vector<1x128xf32> to vector<4x128xf32>
    %23 = arith.mulf %22, %11 : vector<4x128xf32>
    %cst_11 = arith.constant dense<0.000000e+00> : vector<4xf32>
    %24 = vector.multi_reduction <add>, %23, %cst_11 [1] : vector<4x128xf32> to vector<4xf32>
    %25 = vector.shape_cast %24 : vector<4xf32> to vector<4x1xf32>
    %26 = arith.addf %2, %25 : vector<4x1xf32>
    %27 = vector.extract_strided_slice %11 {offsets = [2, 0], sizes = [1, 128], strides = [1, 1]} : vector<4x128xf32> to vector<1x128xf32>
    %28 = vector.broadcast %27 : vector<1x128xf32> to vector<4x128xf32>
    %29 = arith.mulf %28, %11 : vector<4x128xf32>
    %cst_12 = arith.constant dense<0.000000e+00> : vector<4xf32>
    %30 = vector.multi_reduction <add>, %29, %cst_12 [1] : vector<4x128xf32> to vector<4xf32>
    %31 = vector.shape_cast %30 : vector<4xf32> to vector<4x1xf32>
    %32 = arith.addf %3, %31 : vector<4x1xf32>
    %33 = vector.extract_strided_slice %11 {offsets = [3, 0], sizes = [1, 128], strides = [1, 1]} : vector<4x128xf32> to vector<1x128xf32>
    %34 = vector.broadcast %33 : vector<1x128xf32> to vector<4x128xf32>
    %35 = arith.mulf %34, %11 : vector<4x128xf32>
    %cst_13 = arith.constant dense<0.000000e+00> : vector<4xf32>
    %36 = vector.multi_reduction <add>, %35, %cst_13 [1] : vector<4x128xf32> to vector<4xf32>
    %37 = vector.shape_cast %36 : vector<4xf32> to vector<4x1xf32>
    %38 = arith.addf %4, %37 : vector<4x1xf32>
    %39 = arith.subf %6, %11 : vector<4x128xf32>
    %cst_14 = arith.constant 2.500000e-01 : f32
    %40 = vector.broadcast %cst_14 : f32 to vector<4x128xf32>
    %41 = arith.mulf %39, %40 : vector<4x128xf32>
    %c1 = arith.constant 1 : index
    %c0_15 = arith.constant 0 : index
    %c0_16 = arith.constant 0 : index
    %c0_17 = arith.constant 0 : index
    %42 = vector.load %arg2[%c1, %c0_15, %c0_16, %c0_17] : memref<4x1x4x128xf32, #tpu.memory_space<vmem>>, vector<1x1x4x128xf32>
    %43 = vector.shape_cast %42 : vector<1x1x4x128xf32> to vector<4x128xf32>
    %44 = arith.addf %41, %43 : vector<4x128xf32>
    %cst_18 = arith.constant 0.000000e+00 : f32
    %cst_19 = arith.constant 4.000000e+00 : f32
    %45 = vector.broadcast %cst_18 : f32 to vector<4x128xf32>
    %46 = arith.maximumf %45, %44 : vector<4x128xf32>
    %47 = vector.broadcast %cst_19 : f32 to vector<4x128xf32>
    %48 = arith.minimumf %47, %46 : vector<4x128xf32>
    %49 = math.roundeven %48 : vector<4x128xf32>
    %cst_20 = arith.constant dense<0.000000e+00> : vector<4xf32>
    %50 = vector.multi_reduction <add>, %49, %cst_20 [1] : vector<4x128xf32> to vector<4xf32>
    %51 = vector.shape_cast %50 : vector<4xf32> to vector<4x1xf32>
    %52 = arith.addf %14, %51 : vector<4x1xf32>
    %53 = vector.extract_strided_slice %49 {offsets = [0, 0], sizes = [1, 128], strides = [1, 1]} : vector<4x128xf32> to vector<1x128xf32>
    %54 = vector.broadcast %53 : vector<1x128xf32> to vector<4x128xf32>
    %55 = arith.mulf %54, %49 : vector<4x128xf32>
    %cst_21 = arith.constant dense<0.000000e+00> : vector<4xf32>
    %56 = vector.multi_reduction <add>, %55, %cst_21 [1] : vector<4x128xf32> to vector<4xf32>
    %57 = vector.shape_cast %56 : vector<4xf32> to vector<4x1xf32>
    %58 = arith.addf %20, %57 : vector<4x1xf32>
    %59 = vector.extract_strided_slice %49 {offsets = [1, 0], sizes = [1, 128], strides = [1, 1]} : vector<4x128xf32> to vector<1x128xf32>
    %60 = vector.broadcast %59 : vector<1x128xf32> to vector<4x128xf32>
    %61 = arith.mulf %60, %49 : vector<4x128xf32>
    %cst_22 = arith.constant dense<0.000000e+00> : vector<4xf32>
    %62 = vector.multi_reduction <add>, %61, %cst_22 [1] : vector<4x128xf32> to vector<4xf32>
    %63 = vector.shape_cast %62 : vector<4xf32> to vector<4x1xf32>
    %64 = arith.addf %26, %63 : vector<4x1xf32>
    %65 = vector.extract_strided_slice %49 {offsets = [2, 0], sizes = [1, 128], strides = [1, 1]} : vector<4x128xf32> to vector<1x128xf32>
    %66 = vector.broadcast %65 : vector<1x128xf32> to vector<4x128xf32>
    %67 = arith.mulf %66, %49 : vector<4x128xf32>
    %cst_23 = arith.constant dense<0.000000e+00> : vector<4xf32>
    %68 = vector.multi_reduction <add>, %67, %cst_23 [1] : vector<4x128xf32> to vector<4xf32>
    %69 = vector.shape_cast %68 : vector<4xf32> to vector<4x1xf32>
    %70 = arith.addf %32, %69 : vector<4x1xf32>
    %71 = vector.extract_strided_slice %49 {offsets = [3, 0], sizes = [1, 128], strides = [1, 1]} : vector<4x128xf32> to vector<1x128xf32>
    %72 = vector.broadcast %71 : vector<1x128xf32> to vector<4x128xf32>
    %73 = arith.mulf %72, %49 : vector<4x128xf32>
    %cst_24 = arith.constant dense<0.000000e+00> : vector<4xf32>
    %74 = vector.multi_reduction <add>, %73, %cst_24 [1] : vector<4x128xf32> to vector<4xf32>
    %75 = vector.shape_cast %74 : vector<4xf32> to vector<4x1xf32>
    %76 = arith.addf %38, %75 : vector<4x1xf32>
    %77 = arith.subf %44, %49 : vector<4x128xf32>
    %cst_25 = arith.constant 2.500000e-01 : f32
    %78 = vector.broadcast %cst_25 : f32 to vector<4x128xf32>
    %79 = arith.mulf %77, %78 : vector<4x128xf32>
    %c2 = arith.constant 2 : index
    %c0_26 = arith.constant 0 : index
    %c0_27 = arith.constant 0 : index
    %c0_28 = arith.constant 0 : index
    %80 = vector.load %arg2[%c2, %c0_26, %c0_27, %c0_28] : memref<4x1x4x128xf32, #tpu.memory_space<vmem>>, vector<1x1x4x128xf32>
    %81 = vector.shape_cast %80 : vector<1x1x4x128xf32> to vector<4x128xf32>
    %82 = arith.addf %79, %81 : vector<4x128xf32>
    %cst_29 = arith.constant 0.000000e+00 : f32
    %cst_30 = arith.constant 4.000000e+00 : f32
    %83 = vector.broadcast %cst_29 : f32 to vector<4x128xf32>
    %84 = arith.maximumf %83, %82 : vector<4x128xf32>
    %85 = vector.broadcast %cst_30 : f32 to vector<4x128xf32>
    %86 = arith.minimumf %85, %84 : vector<4x128xf32>
    %87 = math.roundeven %86 : vector<4x128xf32>
    %cst_31 = arith.constant dense<0.000000e+00> : vector<4xf32>
    %88 = vector.multi_reduction <add>, %87, %cst_31 [1] : vector<4x128xf32> to vector<4xf32>
    %89 = vector.shape_cast %88 : vector<4xf32> to vector<4x1xf32>
    %90 = arith.addf %52, %89 : vector<4x1xf32>
    %91 = vector.extract_strided_slice %87 {offsets = [0, 0], sizes = [1, 128], strides = [1, 1]} : vector<4x128xf32> to vector<1x128xf32>
    %92 = vector.broadcast %91 : vector<1x128xf32> to vector<4x128xf32>
    %93 = arith.mulf %92, %87 : vector<4x128xf32>
    %cst_32 = arith.constant dense<0.000000e+00> : vector<4xf32>
    %94 = vector.multi_reduction <add>, %93, %cst_32 [1] : vector<4x128xf32> to vector<4xf32>
    %95 = vector.shape_cast %94 : vector<4xf32> to vector<4x1xf32>
    %96 = arith.addf %58, %95 : vector<4x1xf32>
    %97 = vector.extract_strided_slice %87 {offsets = [1, 0], sizes = [1, 128], strides = [1, 1]} : vector<4x128xf32> to vector<1x128xf32>
    %98 = vector.broadcast %97 : vector<1x128xf32> to vector<4x128xf32>
    %99 = arith.mulf %98, %87 : vector<4x128xf32>
    %cst_33 = arith.constant dense<0.000000e+00> : vector<4xf32>
    %100 = vector.multi_reduction <add>, %99, %cst_33 [1] : vector<4x128xf32> to vector<4xf32>
    %101 = vector.shape_cast %100 : vector<4xf32> to vector<4x1xf32>
    %102 = arith.addf %64, %101 : vector<4x1xf32>
    %103 = vector.extract_strided_slice %87 {offsets = [2, 0], sizes = [1, 128], strides = [1, 1]} : vector<4x128xf32> to vector<1x128xf32>
    %104 = vector.broadcast %103 : vector<1x128xf32> to vector<4x128xf32>
    %105 = arith.mulf %104, %87 : vector<4x128xf32>
    %cst_34 = arith.constant dense<0.000000e+00> : vector<4xf32>
    %106 = vector.multi_reduction <add>, %105, %cst_34 [1] : vector<4x128xf32> to vector<4xf32>
    %107 = vector.shape_cast %106 : vector<4xf32> to vector<4x1xf32>
    %108 = arith.addf %70, %107 : vector<4x1xf32>
    %109 = vector.extract_strided_slice %87 {offsets = [3, 0], sizes = [1, 128], strides = [1, 1]} : vector<4x128xf32> to vector<1x128xf32>
    %110 = vector.broadcast %109 : vector<1x128xf32> to vector<4x128xf32>
    %111 = arith.mulf %110, %87 : vector<4x128xf32>
    %cst_35 = arith.constant dense<0.000000e+00> : vector<4xf32>
    %112 = vector.multi_reduction <add>, %111, %cst_35 [1] : vector<4x128xf32> to vector<4xf32>
    %113 = vector.shape_cast %112 : vector<4xf32> to vector<4x1xf32>
    %114 = arith.addf %76, %113 : vector<4x1xf32>
    %115 = arith.subf %82, %87 : vector<4x128xf32>
    %cst_36 = arith.constant 2.500000e-01 : f32
    %116 = vector.broadcast %cst_36 : f32 to vector<4x128xf32>
    %117 = arith.mulf %115, %116 : vector<4x128xf32>
    %c3 = arith.constant 3 : index
    %c0_37 = arith.constant 0 : index
    %c0_38 = arith.constant 0 : index
    %c0_39 = arith.constant 0 : index
    %118 = vector.load %arg2[%c3, %c0_37, %c0_38, %c0_39] : memref<4x1x4x128xf32, #tpu.memory_space<vmem>>, vector<1x1x4x128xf32>
    %119 = vector.shape_cast %118 : vector<1x1x4x128xf32> to vector<4x128xf32>
    %120 = arith.addf %117, %119 : vector<4x128xf32>
    %cst_40 = arith.constant 0.000000e+00 : f32
    %cst_41 = arith.constant 4.000000e+00 : f32
    %121 = vector.broadcast %cst_40 : f32 to vector<4x128xf32>
    %122 = arith.maximumf %121, %120 : vector<4x128xf32>
    %123 = vector.broadcast %cst_41 : f32 to vector<4x128xf32>
    %124 = arith.minimumf %123, %122 : vector<4x128xf32>
    %125 = math.roundeven %124 : vector<4x128xf32>
    %cst_42 = arith.constant dense<0.000000e+00> : vector<4xf32>
    %126 = vector.multi_reduction <add>, %125, %cst_42 [1] : vector<4x128xf32> to vector<4xf32>
    %127 = vector.shape_cast %126 : vector<4xf32> to vector<4x1xf32>
    %128 = arith.addf %90, %127 : vector<4x1xf32>
    %129 = vector.extract_strided_slice %125 {offsets = [0, 0], sizes = [1, 128], strides = [1, 1]} : vector<4x128xf32> to vector<1x128xf32>
    %130 = vector.broadcast %129 : vector<1x128xf32> to vector<4x128xf32>
    %131 = arith.mulf %130, %125 : vector<4x128xf32>
    %cst_43 = arith.constant dense<0.000000e+00> : vector<4xf32>
    %132 = vector.multi_reduction <add>, %131, %cst_43 [1] : vector<4x128xf32> to vector<4xf32>
    %133 = vector.shape_cast %132 : vector<4xf32> to vector<4x1xf32>
    %134 = arith.addf %96, %133 : vector<4x1xf32>
    %135 = vector.extract_strided_slice %125 {offsets = [1, 0], sizes = [1, 128], strides = [1, 1]} : vector<4x128xf32> to vector<1x128xf32>
    %136 = vector.broadcast %135 : vector<1x128xf32> to vector<4x128xf32>
    %137 = arith.mulf %136, %125 : vector<4x128xf32>
    %cst_44 = arith.constant dense<0.000000e+00> : vector<4xf32>
    %138 = vector.multi_reduction <add>, %137, %cst_44 [1] : vector<4x128xf32> to vector<4xf32>
    %139 = vector.shape_cast %138 : vector<4xf32> to vector<4x1xf32>
    %140 = arith.addf %102, %139 : vector<4x1xf32>
    %141 = vector.extract_strided_slice %125 {offsets = [2, 0], sizes = [1, 128], strides = [1, 1]} : vector<4x128xf32> to vector<1x128xf32>
    %142 = vector.broadcast %141 : vector<1x128xf32> to vector<4x128xf32>
    %143 = arith.mulf %142, %125 : vector<4x128xf32>
    %cst_45 = arith.constant dense<0.000000e+00> : vector<4xf32>
    %144 = vector.multi_reduction <add>, %143, %cst_45 [1] : vector<4x128xf32> to vector<4xf32>
    %145 = vector.shape_cast %144 : vector<4xf32> to vector<4x1xf32>
    %146 = arith.addf %108, %145 : vector<4x1xf32>
    %147 = vector.extract_strided_slice %125 {offsets = [3, 0], sizes = [1, 128], strides = [1, 1]} : vector<4x128xf32> to vector<1x128xf32>
    %148 = vector.broadcast %147 : vector<1x128xf32> to vector<4x128xf32>
    %149 = arith.mulf %148, %125 : vector<4x128xf32>
    %cst_46 = arith.constant dense<0.000000e+00> : vector<4xf32>
    %150 = vector.multi_reduction <add>, %149, %cst_46 [1] : vector<4x128xf32> to vector<4xf32>
    %151 = vector.shape_cast %150 : vector<4xf32> to vector<4x1xf32>
    %152 = arith.addf %114, %151 : vector<4x1xf32>
    %c0_47 = arith.constant 0 : index
    %c0_48 = arith.constant 0 : index
    %c0_49 = arith.constant 0 : index
    %c0_50 = arith.constant 0 : index
    %153 = vector.load %arg3[%c0_47, %c0_48, %c0_49, %c0_50] : memref<1x1x4x5xf32, #tpu.memory_space<vmem>>, vector<1x1x4x1xf32>
    %154 = vector.shape_cast %153 : vector<1x1x4x1xf32> to vector<4x1xf32>
    %155 = vector.shape_cast %128 : vector<4x1xf32> to vector<1x1x4x1xf32>
    tpu.vector_store %arg3[%c0_47, %c0_48, %c0_49, %c0_50], %155 {strides = array<i32>} : memref<1x1x4x5xf32, #tpu.memory_space<vmem>>, vector<1x1x4x1xf32>,
    %c0_51 = arith.constant 0 : index
    %c0_52 = arith.constant 0 : index
    %c0_53 = arith.constant 0 : index
    %c1_54 = arith.constant 1 : index
    %156 = vector.load %arg3[%c0_51, %c0_52, %c0_53, %c1_54] : memref<1x1x4x5xf32, #tpu.memory_space<vmem>>, vector<1x1x4x1xf32>
    %157 = vector.shape_cast %156 : vector<1x1x4x1xf32> to vector<4x1xf32>
    %158 = vector.shape_cast %134 : vector<4x1xf32> to vector<1x1x4x1xf32>
    tpu.vector_store %arg3[%c0_51, %c0_52, %c0_53, %c1_54], %158 {strides = array<i32>} : memref<1x1x4x5xf32, #tpu.memory_space<vmem>>, vector<1x1x4x1xf32>,
    %c0_55 = arith.constant 0 : index
    %c0_56 = arith.constant 0 : index
    %c0_57 = arith.constant 0 : index
    %c2_58 = arith.constant 2 : index
    %159 = vector.load %arg3[%c0_55, %c0_56, %c0_57, %c2_58] : memref<1x1x4x5xf32, #tpu.memory_space<vmem>>, vector<1x1x4x1xf32>
    %160 = vector.shape_cast %159 : vector<1x1x4x1xf32> to vector<4x1xf32>
    %161 = vector.shape_cast %140 : vector<4x1xf32> to vector<1x1x4x1xf32>
    tpu.vector_store %arg3[%c0_55, %c0_56, %c0_57, %c2_58], %161 {strides = array<i32>} : memref<1x1x4x5xf32, #tpu.memory_space<vmem>>, vector<1x1x4x1xf32>,
    %c0_59 = arith.constant 0 : index
    %c0_60 = arith.constant 0 : index
    %c0_61 = arith.constant 0 : index
    %c3_62 = arith.constant 3 : index
    %162 = vector.load %arg3[%c0_59, %c0_60, %c0_61, %c3_62] : memref<1x1x4x5xf32, #tpu.memory_space<vmem>>, vector<1x1x4x1xf32>
    %163 = vector.shape_cast %162 : vector<1x1x4x1xf32> to vector<4x1xf32>
    %164 = vector.shape_cast %146 : vector<4x1xf32> to vector<1x1x4x1xf32>
    tpu.vector_store %arg3[%c0_59, %c0_60, %c0_61, %c3_62], %164 {strides = array<i32>} : memref<1x1x4x5xf32, #tpu.memory_space<vmem>>, vector<1x1x4x1xf32>,
    %c0_63 = arith.constant 0 : index
    %c0_64 = arith.constant 0 : index
    %c0_65 = arith.constant 0 : index
    %c4 = arith.constant 4 : index
    %165 = vector.load %arg3[%c0_63, %c0_64, %c0_65, %c4] : memref<1x1x4x5xf32, #tpu.memory_space<vmem>>, vector<1x1x4x1xf32>
    %166 = vector.shape_cast %165 : vector<1x1x4x1xf32> to vector<4x1xf32>
    %167 = vector.shape_cast %152 : vector<4x1xf32> to vector<1x1x4x1xf32>
    tpu.vector_store %arg3[%c0_63, %c0_64, %c0_65, %c4], %167 {strides = array<i32>} : memref<1x1x4x5xf32, #tpu.memory_space<vmem>>, vector<1x1x4x1xf32>,
    return
  }
  func.func @transform_0(%arg0: i32, %arg1: i32) -> (i32, i32, i32, i32) {
    %c0_i32 = arith.constant 0 : i32
    %c0_i32_0 = arith.constant 0 : i32
    %c0_i32_1 = arith.constant 0 : i32
    return %c0_i32, %arg0, %c0_i32_0, %arg1 : i32, i32, i32, i32
  }
  func.func @transform_1(%arg0: i32, %arg1: i32) -> (i32, i32, i32, i32) {
    %c0_i32 = arith.constant 0 : i32
    %c0_i32_0 = arith.constant 0 : i32
    %c0_i32_1 = arith.constant 0 : i32
    return %arg0, %arg1, %c0_i32, %c0_i32_0 : i32, i32, i32, i32
  }
}

module attributes {stable_mosaic.version = 11 : i64} {
  func.func @_lif_conv_bn_kernel(%arg0: i32, %arg1: i32, %arg2: memref<4x1x4x128xf32, #tpu.memory_space<vmem>>, %arg3: memref<8x4xf32, #tpu.memory_space<vmem>>, %arg4: memref<8x1xf32, #tpu.memory_space<vmem>>, %arg5: memref<4x1x8x128xf32, #tpu.memory_space<vmem>>) attributes {dimension_semantics = [#tpu.dimension_semantics<parallel>, #tpu.dimension_semantics<parallel>], iteration_bounds = array<i64: 2, 2>, scalar_prefetch = 0 : i64, scratch_operands = 0 : i64, tpu.core_type = #tpu.core_type<tc>, window_params = [{transform_indices = @transform_0, window_bounds = array<i64: 4, 1, 4, 128>}, {pipeline_mode = #tpu.pipeline_mode<synchronous>, transform_indices = @transform_1, window_bounds = array<i64: 8, 4>}, {pipeline_mode = #tpu.pipeline_mode<synchronous>, transform_indices = @transform_2, window_bounds = array<i64: 8, 1>}, {transform_indices = @transform_3, window_bounds = array<i64: 4, 1, 8, 128>}]} {
    %c0 = arith.constant 0 : index
    %c0_0 = arith.constant 0 : index
    %0 = vector.load %arg3[%c0, %c0_0] : memref<8x4xf32, #tpu.memory_space<vmem>>, vector<8x4xf32>
    %c0_1 = arith.constant 0 : index
    %c0_2 = arith.constant 0 : index
    %1 = vector.load %arg4[%c0_1, %c0_2] : memref<8x1xf32, #tpu.memory_space<vmem>>, vector<8x1xf32>
    %c0_3 = arith.constant 0 : index
    %c0_4 = arith.constant 0 : index
    %c0_5 = arith.constant 0 : index
    %c0_6 = arith.constant 0 : index
    %2 = vector.load %arg2[%c0_3, %c0_4, %c0_5, %c0_6] : memref<4x1x4x128xf32, #tpu.memory_space<vmem>>, vector<1x1x4x128xf32>
    %3 = vector.shape_cast %2 : vector<1x1x4x128xf32> to vector<4x128xf32>
    %cst = arith.constant 0.000000e+00 : f32
    %cst_7 = arith.constant 4.000000e+00 : f32
    %4 = vector.broadcast %cst : f32 to vector<4x128xf32>
    %5 = arith.maximumf %4, %3 : vector<4x128xf32>
    %6 = vector.broadcast %cst_7 : f32 to vector<4x128xf32>
    %7 = arith.minimumf %6, %5 : vector<4x128xf32>
    %8 = math.roundeven %7 : vector<4x128xf32>
    %9 = vector.extract_strided_slice %0 {offsets = [0, 0], sizes = [8, 1], strides = [1, 1]} : vector<8x4xf32> to vector<8x1xf32>
    %10 = vector.extract_strided_slice %8 {offsets = [0, 0], sizes = [1, 128], strides = [1, 1]} : vector<4x128xf32> to vector<1x128xf32>
    %11 = vector.broadcast %9 : vector<8x1xf32> to vector<8x128xf32>
    %12 = vector.broadcast %10 : vector<1x128xf32> to vector<8x128xf32>
    %13 = arith.mulf %11, %12 : vector<8x128xf32>
    %14 = vector.extract_strided_slice %0 {offsets = [0, 1], sizes = [8, 1], strides = [1, 1]} : vector<8x4xf32> to vector<8x1xf32>
    %15 = vector.extract_strided_slice %8 {offsets = [1, 0], sizes = [1, 128], strides = [1, 1]} : vector<4x128xf32> to vector<1x128xf32>
    %16 = vector.broadcast %14 : vector<8x1xf32> to vector<8x128xf32>
    %17 = vector.broadcast %15 : vector<1x128xf32> to vector<8x128xf32>
    %18 = arith.mulf %16, %17 : vector<8x128xf32>
    %19 = arith.addf %13, %18 : vector<8x128xf32>
    %20 = vector.extract_strided_slice %0 {offsets = [0, 2], sizes = [8, 1], strides = [1, 1]} : vector<8x4xf32> to vector<8x1xf32>
    %21 = vector.extract_strided_slice %8 {offsets = [2, 0], sizes = [1, 128], strides = [1, 1]} : vector<4x128xf32> to vector<1x128xf32>
    %22 = vector.broadcast %20 : vector<8x1xf32> to vector<8x128xf32>
    %23 = vector.broadcast %21 : vector<1x128xf32> to vector<8x128xf32>
    %24 = arith.mulf %22, %23 : vector<8x128xf32>
    %25 = arith.addf %19, %24 : vector<8x128xf32>
    %26 = vector.extract_strided_slice %0 {offsets = [0, 3], sizes = [8, 1], strides = [1, 1]} : vector<8x4xf32> to vector<8x1xf32>
    %27 = vector.extract_strided_slice %8 {offsets = [3, 0], sizes = [1, 128], strides = [1, 1]} : vector<4x128xf32> to vector<1x128xf32>
    %28 = vector.broadcast %26 : vector<8x1xf32> to vector<8x128xf32>
    %29 = vector.broadcast %27 : vector<1x128xf32> to vector<8x128xf32>
    %30 = arith.mulf %28, %29 : vector<8x128xf32>
    %31 = arith.addf %25, %30 : vector<8x128xf32>
    %32 = vector.broadcast %1 : vector<8x1xf32> to vector<8x128xf32>
    %33 = arith.addf %31, %32 : vector<8x128xf32>
    %c0_8 = arith.constant 0 : index
    %c0_9 = arith.constant 0 : index
    %c0_10 = arith.constant 0 : index
    %c0_11 = arith.constant 0 : index
    %34 = vector.load %arg5[%c0_8, %c0_9, %c0_10, %c0_11] : memref<4x1x8x128xf32, #tpu.memory_space<vmem>>, vector<1x1x8x128xf32>
    %35 = vector.shape_cast %34 : vector<1x1x8x128xf32> to vector<8x128xf32>
    %36 = vector.shape_cast %33 : vector<8x128xf32> to vector<1x1x8x128xf32>
    tpu.vector_store %arg5[%c0_8, %c0_9, %c0_10, %c0_11], %36 {strides = array<i32>} : memref<4x1x8x128xf32, #tpu.memory_space<vmem>>, vector<1x1x8x128xf32>,
    %37 = arith.subf %3, %8 : vector<4x128xf32>
    %cst_12 = arith.constant 2.500000e-01 : f32
    %38 = vector.broadcast %cst_12 : f32 to vector<4x128xf32>
    %39 = arith.mulf %37, %38 : vector<4x128xf32>
    %c1 = arith.constant 1 : index
    %c0_13 = arith.constant 0 : index
    %c0_14 = arith.constant 0 : index
    %c0_15 = arith.constant 0 : index
    %40 = vector.load %arg2[%c1, %c0_13, %c0_14, %c0_15] : memref<4x1x4x128xf32, #tpu.memory_space<vmem>>, vector<1x1x4x128xf32>
    %41 = vector.shape_cast %40 : vector<1x1x4x128xf32> to vector<4x128xf32>
    %42 = arith.addf %39, %41 : vector<4x128xf32>
    %cst_16 = arith.constant 0.000000e+00 : f32
    %cst_17 = arith.constant 4.000000e+00 : f32
    %43 = vector.broadcast %cst_16 : f32 to vector<4x128xf32>
    %44 = arith.maximumf %43, %42 : vector<4x128xf32>
    %45 = vector.broadcast %cst_17 : f32 to vector<4x128xf32>
    %46 = arith.minimumf %45, %44 : vector<4x128xf32>
    %47 = math.roundeven %46 : vector<4x128xf32>
    %48 = vector.extract_strided_slice %0 {offsets = [0, 0], sizes = [8, 1], strides = [1, 1]} : vector<8x4xf32> to vector<8x1xf32>
    %49 = vector.extract_strided_slice %47 {offsets = [0, 0], sizes = [1, 128], strides = [1, 1]} : vector<4x128xf32> to vector<1x128xf32>
    %50 = vector.broadcast %48 : vector<8x1xf32> to vector<8x128xf32>
    %51 = vector.broadcast %49 : vector<1x128xf32> to vector<8x128xf32>
    %52 = arith.mulf %50, %51 : vector<8x128xf32>
    %53 = vector.extract_strided_slice %0 {offsets = [0, 1], sizes = [8, 1], strides = [1, 1]} : vector<8x4xf32> to vector<8x1xf32>
    %54 = vector.extract_strided_slice %47 {offsets = [1, 0], sizes = [1, 128], strides = [1, 1]} : vector<4x128xf32> to vector<1x128xf32>
    %55 = vector.broadcast %53 : vector<8x1xf32> to vector<8x128xf32>
    %56 = vector.broadcast %54 : vector<1x128xf32> to vector<8x128xf32>
    %57 = arith.mulf %55, %56 : vector<8x128xf32>
    %58 = arith.addf %52, %57 : vector<8x128xf32>
    %59 = vector.extract_strided_slice %0 {offsets = [0, 2], sizes = [8, 1], strides = [1, 1]} : vector<8x4xf32> to vector<8x1xf32>
    %60 = vector.extract_strided_slice %47 {offsets = [2, 0], sizes = [1, 128], strides = [1, 1]} : vector<4x128xf32> to vector<1x128xf32>
    %61 = vector.broadcast %59 : vector<8x1xf32> to vector<8x128xf32>
    %62 = vector.broadcast %60 : vector<1x128xf32> to vector<8x128xf32>
    %63 = arith.mulf %61, %62 : vector<8x128xf32>
    %64 = arith.addf %58, %63 : vector<8x128xf32>
    %65 = vector.extract_strided_slice %0 {offsets = [0, 3], sizes = [8, 1], strides = [1, 1]} : vector<8x4xf32> to vector<8x1xf32>
    %66 = vector.extract_strided_slice %47 {offsets = [3, 0], sizes = [1, 128], strides = [1, 1]} : vector<4x128xf32> to vector<1x128xf32>
    %67 = vector.broadcast %65 : vector<8x1xf32> to vector<8x128xf32>
    %68 = vector.broadcast %66 : vector<1x128xf32> to vector<8x128xf32>
    %69 = arith.mulf %67, %68 : vector<8x128xf32>
    %70 = arith.addf %64, %69 : vector<8x128xf32>
    %71 = vector.broadcast %1 : vector<8x1xf32> to vector<8x128xf32>
    %72 = arith.addf %70, %71 : vector<8x128xf32>
    %c1_18 = arith.constant 1 : index
    %c0_19 = arith.constant 0 : index
    %c0_20 = arith.constant 0 : index
    %c0_21 = arith.constant 0 : index
    %73 = vector.load %arg5[%c1_18, %c0_19, %c0_20, %c0_21] : memref<4x1x8x128xf32, #tpu.memory_space<vmem>>, vector<1x1x8x128xf32>
    %74 = vector.shape_cast %73 : vector<1x1x8x128xf32> to vector<8x128xf32>
    %75 = vector.shape_cast %72 : vector<8x128xf32> to vector<1x1x8x128xf32>
    tpu.vector_store %arg5[%c1_18, %c0_19, %c0_20, %c0_21], %75 {strides = array<i32>} : memref<4x1x8x128xf32, #tpu.memory_space<vmem>>, vector<1x1x8x128xf32>,
    %76 = arith.subf %42, %47 : vector<4x128xf32>
    %cst_22 = arith.constant 2.500000e-01 : f32
    %77 = vector.broadcast %cst_22 : f32 to vector<4x128xf32>
    %78 = arith.mulf %76, %77 : vector<4x128xf32>
    %c2 = arith.constant 2 : index
    %c0_23 = arith.constant 0 : index
    %c0_24 = arith.constant 0 : index
    %c0_25 = arith.constant 0 : index
    %79 = vector.load %arg2[%c2, %c0_23, %c0_24, %c0_25] : memref<4x1x4x128xf32, #tpu.memory_space<vmem>>, vector<1x1x4x128xf32>
    %80 = vector.shape_cast %79 : vector<1x1x4x128xf32> to vector<4x128xf32>
    %81 = arith.addf %78, %80 : vector<4x128xf32>
    %cst_26 = arith.constant 0.000000e+00 : f32
    %cst_27 = arith.constant 4.000000e+00 : f32
    %82 = vector.broadcast %cst_26 : f32 to vector<4x128xf32>
    %83 = arith.maximumf %82, %81 : vector<4x128xf32>
    %84 = vector.broadcast %cst_27 : f32 to vector<4x128xf32>
    %85 = arith.minimumf %84, %83 : vector<4x128xf32>
    %86 = math.roundeven %85 : vector<4x128xf32>
    %87 = vector.extract_strided_slice %0 {offsets = [0, 0], sizes = [8, 1], strides = [1, 1]} : vector<8x4xf32> to vector<8x1xf32>
    %88 = vector.extract_strided_slice %86 {offsets = [0, 0], sizes = [1, 128], strides = [1, 1]} : vector<4x128xf32> to vector<1x128xf32>
    %89 = vector.broadcast %87 : vector<8x1xf32> to vector<8x128xf32>
    %90 = vector.broadcast %88 : vector<1x128xf32> to vector<8x128xf32>
    %91 = arith.mulf %89, %90 : vector<8x128xf32>
    %92 = vector.extract_strided_slice %0 {offsets = [0, 1], sizes = [8, 1], strides = [1, 1]} : vector<8x4xf32> to vector<8x1xf32>
    %93 = vector.extract_strided_slice %86 {offsets = [1, 0], sizes = [1, 128], strides = [1, 1]} : vector<4x128xf32> to vector<1x128xf32>
    %94 = vector.broadcast %92 : vector<8x1xf32> to vector<8x128xf32>
    %95 = vector.broadcast %93 : vector<1x128xf32> to vector<8x128xf32>
    %96 = arith.mulf %94, %95 : vector<8x128xf32>
    %97 = arith.addf %91, %96 : vector<8x128xf32>
    %98 = vector.extract_strided_slice %0 {offsets = [0, 2], sizes = [8, 1], strides = [1, 1]} : vector<8x4xf32> to vector<8x1xf32>
    %99 = vector.extract_strided_slice %86 {offsets = [2, 0], sizes = [1, 128], strides = [1, 1]} : vector<4x128xf32> to vector<1x128xf32>
    %100 = vector.broadcast %98 : vector<8x1xf32> to vector<8x128xf32>
    %101 = vector.broadcast %99 : vector<1x128xf32> to vector<8x128xf32>
    %102 = arith.mulf %100, %101 : vector<8x128xf32>
    %103 = arith.addf %97, %102 : vector<8x128xf32>
    %104 = vector.extract_strided_slice %0 {offsets = [0, 3], sizes = [8, 1], strides = [1, 1]} : vector<8x4xf32> to vector<8x1xf32>
    %105 = vector.extract_strided_slice %86 {offsets = [3, 0], sizes = [1, 128], strides = [1, 1]} : vector<4x128xf32> to vector<1x128xf32>
    %106 = vector.broadcast %104 : vector<8x1xf32> to vector<8x128xf32>
    %107 = vector.broadcast %105 : vector<1x128xf32> to vector<8x128xf32>
    %108 = arith.mulf %106, %107 : vector<8x128xf32>
    %109 = arith.addf %103, %108 : vector<8x128xf32>
    %110 = vector.broadcast %1 : vector<8x1xf32> to vector<8x128xf32>
    %111 = arith.addf %109, %110 : vector<8x128xf32>
    %c2_28 = arith.constant 2 : index
    %c0_29 = arith.constant 0 : index
    %c0_30 = arith.constant 0 : index
    %c0_31 = arith.constant 0 : index
    %112 = vector.load %arg5[%c2_28, %c0_29, %c0_30, %c0_31] : memref<4x1x8x128xf32, #tpu.memory_space<vmem>>, vector<1x1x8x128xf32>
    %113 = vector.shape_cast %112 : vector<1x1x8x128xf32> to vector<8x128xf32>
    %114 = vector.shape_cast %111 : vector<8x128xf32> to vector<1x1x8x128xf32>
    tpu.vector_store %arg5[%c2_28, %c0_29, %c0_30, %c0_31], %114 {strides = array<i32>} : memref<4x1x8x128xf32, #tpu.memory_space<vmem>>, vector<1x1x8x128xf32>,
    %115 = arith.subf %81, %86 : vector<4x128xf32>
    %cst_32 = arith.constant 2.500000e-01 : f32
    %116 = vector.broadcast %cst_32 : f32 to vector<4x128xf32>
    %117 = arith.mulf %115, %116 : vector<4x128xf32>
    %c3 = arith.constant 3 : index
    %c0_33 = arith.constant 0 : index
    %c0_34 = arith.constant 0 : index
    %c0_35 = arith.constant 0 : index
    %118 = vector.load %arg2[%c3, %c0_33, %c0_34, %c0_35] : memref<4x1x4x128xf32, #tpu.memory_space<vmem>>, vector<1x1x4x128xf32>
    %119 = vector.shape_cast %118 : vector<1x1x4x128xf32> to vector<4x128xf32>
    %120 = arith.addf %117, %119 : vector<4x128xf32>
    %cst_36 = arith.constant 0.000000e+00 : f32
    %cst_37 = arith.constant 4.000000e+00 : f32
    %121 = vector.broadcast %cst_36 : f32 to vector<4x128xf32>
    %122 = arith.maximumf %121, %120 : vector<4x128xf32>
    %123 = vector.broadcast %cst_37 : f32 to vector<4x128xf32>
    %124 = arith.minimumf %123, %122 : vector<4x128xf32>
    %125 = math.roundeven %124 : vector<4x128xf32>
    %126 = vector.extract_strided_slice %0 {offsets = [0, 0], sizes = [8, 1], strides = [1, 1]} : vector<8x4xf32> to vector<8x1xf32>
    %127 = vector.extract_strided_slice %125 {offsets = [0, 0], sizes = [1, 128], strides = [1, 1]} : vector<4x128xf32> to vector<1x128xf32>
    %128 = vector.broadcast %126 : vector<8x1xf32> to vector<8x128xf32>
    %129 = vector.broadcast %127 : vector<1x128xf32> to vector<8x128xf32>
    %130 = arith.mulf %128, %129 : vector<8x128xf32>
    %131 = vector.extract_strided_slice %0 {offsets = [0, 1], sizes = [8, 1], strides = [1, 1]} : vector<8x4xf32> to vector<8x1xf32>
    %132 = vector.extract_strided_slice %125 {offsets = [1, 0], sizes = [1, 128], strides = [1, 1]} : vector<4x128xf32> to vector<1x128xf32>
    %133 = vector.broadcast %131 : vector<8x1xf32> to vector<8x128xf32>
    %134 = vector.broadcast %132 : vector<1x128xf32> to vector<8x128xf32>
    %135 = arith.mulf %133, %134 : vector<8x128xf32>
    %136 = arith.addf %130, %135 : vector<8x128xf32>
    %137 = vector.extract_strided_slice %0 {offsets = [0, 2], sizes = [8, 1], strides = [1, 1]} : vector<8x4xf32> to vector<8x1xf32>
    %138 = vector.extract_strided_slice %125 {offsets = [2, 0], sizes = [1, 128], strides = [1, 1]} : vector<4x128xf32> to vector<1x128xf32>
    %139 = vector.broadcast %137 : vector<8x1xf32> to vector<8x128xf32>
    %140 = vector.broadcast %138 : vector<1x128xf32> to vector<8x128xf32>
    %141 = arith.mulf %139, %140 : vector<8x128xf32>
    %142 = arith.addf %136, %141 : vector<8x128xf32>
    %143 = vector.extract_strided_slice %0 {offsets = [0, 3], sizes = [8, 1], strides = [1, 1]} : vector<8x4xf32> to vector<8x1xf32>
    %144 = vector.extract_strided_slice %125 {offsets = [3, 0], sizes = [1, 128], strides = [1, 1]} : vector<4x128xf32> to vector<1x128xf32>
    %145 = vector.broadcast %143 : vector<8x1xf32> to vector<8x128xf32>
    %146 = vector.broadcast %144 : vector<1x128xf32> to vector<8x128xf32>
    %147 = arith.mulf %145, %146 : vector<8x128xf32>
    %148 = arith.addf %142, %147 : vector<8x128xf32>
    %149 = vector.broadcast %1 : vector<8x1xf32> to vector<8x128xf32>
    %150 = arith.addf %148, %149 : vector<8x128xf32>
    %c3_38 = arith.constant 3 : index
    %c0_39 = arith.constant 0 : index
    %c0_40 = arith.constant 0 : index
    %c0_41 = arith.constant 0 : index
    %151 = vector.load %arg5[%c3_38, %c0_39, %c0_40, %c0_41] : memref<4x1x8x128xf32, #tpu.memory_space<vmem>>, vector<1x1x8x128xf32>
    %152 = vector.shape_cast %151 : vector<1x1x8x128xf32> to vector<8x128xf32>
    %153 = vector.shape_cast %150 : vector<8x128xf32> to vector<1x1x8x128xf32>
    tpu.vector_store %arg5[%c3_38, %c0_39, %c0_40, %c0_41], %153 {strides = array<i32>} : memref<4x1x8x128xf32, #tpu.memory_space<vmem>>, vector<1x1x8x128xf32>,
    return
  }
  func.func @transform_0(%arg0: i32, %arg1: i32) -> (i32, i32, i32, i32) {
    %c0_i32 = arith.constant 0 : i32
    %c0_i32_0 = arith.constant 0 : i32
    %c0_i32_1 = arith.constant 0 : i32
    return %c0_i32, %arg0, %c0_i32_0, %arg1 : i32, i32, i32, i32
  }
  func.func @transform_1(%arg0: i32, %arg1: i32) -> (i32, i32) {
    %c0_i32 = arith.constant 0 : i32
    %c0_i32_0 = arith.constant 0 : i32
    %c0_i32_1 = arith.constant 0 : i32
    return %c0_i32, %c0_i32_0 : i32, i32
  }
  func.func @transform_2(%arg0: i32, %arg1: i32) -> (i32, i32) {
    %c0_i32 = arith.constant 0 : i32
    %c0_i32_0 = arith.constant 0 : i32
    %c0_i32_1 = arith.constant 0 : i32
    return %c0_i32, %c0_i32_0 : i32, i32
  }
  func.func @transform_3(%arg0: i32, %arg1: i32) -> (i32, i32, i32, i32) {
    %c0_i32 = arith.constant 0 : i32
    %c0_i32_0 = arith.constant 0 : i32
    %c0_i32_1 = arith.constant 0 : i32
    return %c0_i32, %arg0, %c0_i32_0, %arg1 : i32, i32, i32, i32
  }
}

</mosaic_0001>

<llo_original>
// kernel: spiking_conv_layer.2
$region0: #{spiking_conv_layer.2}
  #allocation0 [shape = 'u32[]', space=smem, size = 0x4, offset = 0x4, fixed_abs, tag = 'smem constant byte address 0x4 - core index']
  #allocation1 [shape = 'u32[72,128]{1,0:T(1,128)}', space=vmem, size = 0x9000, scoped, tag = 'internal scratch']
  %s0 = inlined_call_operand.vmem [shape: f32[4,2,4,256], index: 0, kind: input, shape index: {}]
  %s1 = inlined_call_operand.vmem [shape: f32[2,2,4,5], index: 1, kind: output, shape index: {}]
  %s2 = sld [smem:[#allocation0]]
  $region78: #{spiking_conv_layer.2} parent=0
    _
  %s4 = ssub.s32 1, %s2
  %s5 = scalar_select 0, %s4, %s2
  $region1: #{spiking_conv_layer.2} parent=0
    #allocation2 [shape = 'u8[16384]{0}', space=vmem, size = 0x4000, scoped, tag = 'input window, operand 0']
    loop: start=0, step=1, limit=6
    $region2: #{spiking_conv_layer.2} parent=1 // loop_pre_header
      _
    $region3: #{spiking_conv_layer.2} parent=1 // loop_header
      %s7 = sphi 0, %s11
      %p8 = scmp.ge.s32.totalorder %s7, 6
      %s14 = sphi 0, %s26
      %s15 = sphi 0, %s22
      %s16 = sphi 0, %s14
      %s17 = sphi 0, %s15
      %s18 = sphi 0, %s16
      %s19 = sphi 0, %s17
      %s31 = sphi 0, %s33
      %s34 = sphi 0, %s31
      %s35 = sphi 0, %s34
      %s51 = sphi 0, %s35
      %s59 = sphi 0, %s61
      %s62 = sphi 0, %s59
      %s63 = sphi 0, %s62
      %s79 = sphi 0, %s63
    $region4: #{spiking_conv_layer.2} parent=1 // loop_header_branch
      %10 = sbr.rel (%p8) target = $region8
    $region5: #{spiking_conv_layer.2} parent=1 // loop_body
      %s12 = ssub.s32 %s7, 1
      %s13 = ssub.s32 %s7, 2
      %s20 = sadd.s32 1, %s15
      %p21 = scmp.ge.s32.totalorder %s20, 2
      %s22 = scalar_select %p21, 0, %s20
      %s23 = sadd.s32 1, %s14
      %s24 = scalar_select %p21, %s23, %s14
      %p25 = scmp.ge.s32.totalorder %s24, 2
      %s26 = scalar_select %p25, 0, %s24
      %s27 = ssub.s32 %s14, %s26
      %s28 = ssub.s32 %s15, %s22
      %s29 = sor.u32 %s27, %s28
      %p30 = scmp.eq.s32.totalorder %s29, 0
      %s32 = sadd.s32 %s31, 1
      %s33 = scalar_select %p30, %s31, %s32
      %p36 = pneg %p30
      %p37 = scmp.eq.s32.totalorder %s7, 3
      %p38 = por %p36, %p37
      %p39 = scmp.ne.s32.totalorder %s31, %s34
      %p40 = scmp.eq.s32.totalorder %s7, 0
      %p41 = por %p39, %p40
      %p42 = scmp.ne.s32.totalorder %s31, %s34
      %p43 = scmp.eq.s32.totalorder %s12, 3
      %p44 = por %p42, %p43
      %p45 = scmp.ne.s32.totalorder %s34, %s35
      %p46 = scmp.eq.s32.totalorder %s12, 0
      %p47 = por %p45, %p46
      %p48 = scmp.ne.s32.totalorder %s34, %s35
      %p49 = scmp.eq.s32.totalorder %s13, 3
      %p50 = por %p48, %p49
      %p52 = scmp.ne.s32.totalorder %s35, %s51
      %p53 = scmp.eq.s32.totalorder %s13, 0
      %p54 = por %p52, %p53
      %s55 = ssub.s32 %s14, %s26
      %s56 = ssub.s32 %s15, %s22
      %s57 = sor.u32 %s55, %s56
      %p58 = scmp.eq.s32.totalorder %s57, 0
      %s60 = sadd.s32 %s59, 1
      %s61 = scalar_select %p58, %s59, %s60
      %p64 = pneg %p58
      %p65 = scmp.eq.s32.totalorder %s7, 3
      %p66 = por %p64, %p65
      %p67 = scmp.ne.s32.totalorder %s59, %s62
      %p68 = scmp.eq.s32.totalorder %s7, 0
      %p69 = por %p67, %p68
      %p70 = scmp.ne.s32.totalorder %s59, %s62
      %p71 = scmp.eq.s32.totalorder %s12, 3
      %p72 = por %p70, %p71
      %p73 = scmp.ne.s32.totalorder %s62, %s63
      %p74 = scmp.eq.s32.totalorder %s12, 0
      %p75 = por %p73, %p74
      %p76 = scmp.ne.s32.totalorder %s62, %s63
      %p77 = scmp.eq.s32.totalorder %s13, 3
      %p78 = por %p76, %p77
      %p80 = scmp.ne.s32.totalorder %s63, %s79
      %p81 = scmp.eq.s32.totalorder %s13, 0
      %p82 = por %p80, %p81
      %p83 = scmp.le.s32.totalorder 1, %s7
      %p84 = scmp.lt.s32.totalorder %s7, 5
      %p85 = pnand %p83, %p84
      %p86 = pneg %p85
      // Predicated region
      $region9: #{spiking_conv_layer.2} parent=5 // pred_check
        _
      $region10: #{spiking_conv_layer.2} parent=5 // pred_check_branch
        %88 = sbr.rel (%p85) target = $region12
      $region11: #{spiking_conv_layer.2} parent=5 // pred_region
        %s89 = ssub.s32 %s7, 1
      $region12: #{spiking_conv_layer.2} parent=5 // pred_fallthru
        _
      %p90 = scmp.lt.s32.totalorder %s7, 4
      // Predicated region
      $region13: #{spiking_conv_layer.2} parent=5 // pred_check
        %p91 = pneg %p90
      $region14: #{spiking_conv_layer.2} parent=5 // pred_check_branch
        %93 = sbr.rel (%p91) target = $region16
      $region15: #{spiking_conv_layer.2} parent=5 // pred_region
        // Predicated region
        $region17: #{spiking_conv_layer.2} parent=15 // pred_check
          %p94 = pneg %p41
        $region18: #{spiking_conv_layer.2} parent=15 // pred_check_branch
          %96 = sbr.rel (%p94) target = $region20
        $region19: #{spiking_conv_layer.2} parent=15 // pred_region
          %s97 = sand.u32 %s31, 1
          %s98 = sand.u32 %s31, 1
          %s99 = smul.addr %s98, 16
          %s100 = scalar_lea.vmem [#allocation2], %s99
          %s101 = smul.addr %s14, 2
          %s102 = sadd.s32 %s15, %s101
          %s103 = smul.addr %s102, 4
          %s104 = scalar_lea.vmem %s0, %s103
          // Predicated region
          $region21: #{spiking_conv_layer.2} parent=19 // pred_check
            _
          $region22: #{spiking_conv_layer.2} parent=19 // pred_check_branch
            %106 = sbr.rel (0) target = $region24
          $region23: #{spiking_conv_layer.2} parent=19 // pred_region
            // Predicated region
            $region25: #{spiking_conv_layer.2} parent=23 // pred_check
              _
            $region26: #{spiking_conv_layer.2} parent=23 // pred_check_branch
              %108 = sbr.rel target = $region28
            $region27: #{spiking_conv_layer.2} parent=23 // pred_region
              // Predicated region
              $region40: #{spiking_conv_layer.2} parent=27 // pred_check
                _
              $region41: #{spiking_conv_layer.2} parent=27 // pred_check_branch
                %130 = sbr.rel (0) target = $region43
              $region42: #{spiking_conv_layer.2} parent=27 // pred_region
                loop: start=0, step=1, limit=1
                $region44: #{spiking_conv_layer.2} parent=42 // loop_pre_header
                  _
                $region45: #{spiking_conv_layer.2} parent=42 // loop_header
                  %s132 = sphi 0, %s136
                  %p133 = scmp.ge.s32.totalorder %s132, 1
                  %s137 = sphi %s104, %s104
                  %s138 = sphi %s100, %s100
                $region46: #{spiking_conv_layer.2} parent=42 // loop_header_branch
                  %135 = sbr.rel (%p133) target = $region50
                $region47: #{spiking_conv_layer.2} parent=42 // loop_body
                  _
                $region48: #{spiking_conv_layer.2} parent=42 // loop_footer
                  %s136 = sadd.s32 1, %s132
                $region49: #{spiking_conv_layer.2} parent=42 // loop_footer_branch
                  %131 = sbr.rel target = $region45
                $region50: #{spiking_conv_layer.2} parent=42 // loop_exit
                  _
                %s140 = ssub.s32 16, 1
                loop: start=0, step=1, limit=1
                $region51: #{spiking_conv_layer.2} parent=42 // loop_pre_header
                  _
                $region52: #{spiking_conv_layer.2} parent=42 // loop_header
                  %s142 = sphi 0, %s146
                  %p143 = scmp.ge.s32.totalorder %s142, 1
                  %s147 = sphi %s104, %s104
                  %s148 = sphi %s100, %s100
                $region53: #{spiking_conv_layer.2} parent=42 // loop_header_branch
                  %145 = sbr.rel (%p143) target = $region57
                $region54: #{spiking_conv_layer.2} parent=42 // loop_body
                  %v149 = vld [vmem:[%s147] sm:%s140]
                  %150 = vst [vmem:[%s148] sm:%s140] %v149
                  %v151 = vld [vmem:[%s147 + $0x10] sm:%s140]
                  %152 = vst [vmem:[%s148 + $0x4] sm:%s140] %v151
                  %v153 = vld [vmem:[%s147 + $0x20] sm:%s140]
                  %154 = vst [vmem:[%s148 + $0x8] sm:%s140] %v153
                  %v155 = vld [vmem:[%s147 + $0x30] sm:%s140]
                  %156 = vst [vmem:[%s148 + $0xc] sm:%s140] %v155
                $region55: #{spiking_conv_layer.2} parent=42 // loop_footer
                  %s146 = sadd.s32 1, %s142
                $region56: #{spiking_conv_layer.2} parent=42 // loop_footer_branch
                  %141 = sbr.rel target = $region52
                $region57: #{spiking_conv_layer.2} parent=42 // loop_exit
                  _
              $region43: #{spiking_conv_layer.2} parent=27 // pred_fallthru
                _
            $region28: #{spiking_conv_layer.2} parent=23 // pred_fallthru
              _
            // Predicated region
            $region29: #{spiking_conv_layer.2} parent=23 // pred_check
              _
            $region30: #{spiking_conv_layer.2} parent=23 // pred_check_branch
              %110 = sbr.rel (0) target = $region32
            $region31: #{spiking_conv_layer.2} parent=23 // pred_region
              %s112 = ssub.s32 16, 1
              loop: start=0, step=1, limit=1
              $region33: #{spiking_conv_layer.2} parent=31 // loop_pre_header
                _
              $region34: #{spiking_conv_layer.2} parent=31 // loop_header
                %s114 = sphi 0, %s118
                %p115 = scmp.ge.s32.totalorder %s114, 1
                %s119 = sphi %s104, %s104
                %s120 = sphi %s100, %s100
              $region35: #{spiking_conv_layer.2} parent=31 // loop_header_branch
                %117 = sbr.rel (%p115) target = $region39
              $region36: #{spiking_conv_layer.2} parent=31 // loop_body
                %v121 = vld [vmem:[%s119] sm:%s112]
                %122 = vst [vmem:[%s120] sm:%s112] %v121
                %v123 = vld [vmem:[%s119 + $0x10] sm:%s112]
                %124 = vst [vmem:[%s120 + $0x4] sm:%s112] %v123
                %v125 = vld [vmem:[%s119 + $0x20] sm:%s112]
                %126 = vst [vmem:[%s120 + $0x8] sm:%s112] %v125
                %v127 = vld [vmem:[%s119 + $0x30] sm:%s112]
                %128 = vst [vmem:[%s120 + $0xc] sm:%s112] %v127
              $region37: #{spiking_conv_layer.2} parent=31 // loop_footer
                %s118 = sadd.s32 1, %s114
              $region38: #{spiking_conv_layer.2} parent=31 // loop_footer_branch
                %113 = sbr.rel target = $region34
              $region39: #{spiking_conv_layer.2} parent=31 // loop_exit
                _
            $region32: #{spiking_conv_layer.2} parent=23 // pred_fallthru
              _
          $region24: #{spiking_conv_layer.2} parent=19 // pred_fallthru
            _
          %157 = vnop
        $region20: #{spiking_conv_layer.2} parent=15 // pred_fallthru
          _
      $region16: #{spiking_conv_layer.2} parent=5 // pred_fallthru
        _
      %p158 = scmp.le.s32.totalorder 1, %s7
      %p159 = scmp.lt.s32.totalorder %s7, 5
      %p160 = pnand %p158, %p159
      %p161 = pneg %p160
      // Predicated region
      $region58: #{spiking_conv_layer.2} parent=5 // pred_check
        _
      $region59: #{spiking_conv_layer.2} parent=5 // pred_check_branch
        %163 = sbr.rel (%p160) target = $region61
      $region60: #{spiking_conv_layer.2} parent=5 // pred_region
        %s164 = ssub.s32 %s7, 1
        %s165 = sand.u32 %s34, 1
        %s166 = sand.u32 %s34, 1
        %s167 = smul.addr %s166, 16
        %s168 = scalar_lea.vmem [#allocation2], %s167
        // Predicated region
        $region62: #{spiking_conv_layer.2} parent=60 // pred_check
          %p169 = pneg %p47
        $region63: #{spiking_conv_layer.2} parent=60 // pred_check_branch
          %171 = sbr.rel (%p169) target = $region65
        $region64: #{spiking_conv_layer.2} parent=60 // pred_region
          _
        $region65: #{spiking_conv_layer.2} parent=60 // pred_fallthru
          _
        %s172 = sand.u32 %s34, 1
        %s173 = sand.u32 %s34, 1
        %s174 = smul.addr %s173, 16
        %s175 = scalar_lea.vmem [#allocation2], %s174
        %p176 = pneg %p47
        %p177 = pneg %p44
        %p178 = pneg %p75
        %p179 = pneg %p72
        %p180 = scmp.lt.s32.totalorder %s16, 1
        %s181 = scalar_select %p180, %s16, 1
        %p182 = scmp.lt.s32.totalorder %s17, 1
        %s183 = scalar_select %p182, %s17, 1
        %s184 = smul.addr %s181, 2
        %s185 = sadd.s32 %s183, %s184
        %s186 = smul.addr %s185, 4
        %s187 = scalar_lea.vmem %s1, %s186
        %p188 = scmp.lt.s32.totalorder %s16, 1
        %s189 = scalar_select %p188, %s16, 1
        %p190 = scmp.lt.s32.totalorder %s17, 1
        %s191 = scalar_select %p190, %s17, 1
        %s192 = smul.addr %s189, 2
        %s193 = sadd.s32 %s191, %s192
        %s194 = smul.addr %s193, 4
        %s195 = scalar_lea.vmem %s1, %s194
        %v196 = vld [vmem:[%s168] sm:$0xf]
        %v197 = vmax.f32 %v196, 0.0
        %v198 = vmin.f32 %v197, 4.0
        %v199 = vround.ne.pseudo %v198
        %vm200 = vcmask 1043456
        %v201 = vsel %vm200, %v199, 0.0
        %202 = vadd.xlane.f32.xlu0 %v201
        %v203 = vpop.xlane.xlu0 %202
        %v204 = vadd.f32 %v203, 0.0
        %v205 = vperm.slane %v199, 0
        %v206 = vmul.f32 %v205, %v199
        %v207 = vsel %vm200, %v206, 0.0
        %208 = vadd.xlane.f32.xlu0 %v207
        %v209 = vpop.xlane.xlu0 %208
        %v210 = vadd.f32 %v209, 0.0
        %v211 = vperm.slane %v199, 1
        %v212 = vmul.f32 %v211, %v199
        %v213 = vsel %vm200, %v212, 0.0
        %214 = vadd.xlane.f32.xlu0 %v213
        %v215 = vpop.xlane.xlu0 %214
        %v216 = vadd.f32 %v215, 0.0
        %v217 = vperm.slane %v199, 2
        %v218 = vmul.f32 %v217, %v199
        %v219 = vsel %vm200, %v218, 0.0
        %220 = vadd.xlane.f32.xlu0 %v219
        %v221 = vpop.xlane.xlu0 %220
        %v222 = vadd.f32 %v221, 0.0
        %v223 = vperm.slane %v199, 3
        %v224 = vmul.f32 %v223, %v199
        %v225 = vsel %vm200, %v224, 0.0
        %226 = vadd.xlane.f32.xlu0 %v225
        %v227 = vpop.xlane.xlu0 %226
        %v228 = vadd.f32 %v227, 0.0
        %v229 = vsub.f32 %v196, %v199
        %v230 = vmul.f32 %v229, 0.25
        %s231 = scalar_lea.vmem %s168, 4 [#allocation2]
        %v232 = vld [vmem:[%s231] sm:$0xf]
        %v233 = vadd.f32 %v230, %v232
        %v234 = vmax.f32 %v233, 0.0
        %v235 = vmin.f32 %v234, 4.0
        %v236 = vround.ne.pseudo %v235
        %v237 = vsel %vm200, %v236, 0.0
        %238 = vadd.xlane.f32.xlu0 %v237
        %v239 = vpop.xlane.xlu0 %238
        %v240 = vadd.f32 %v204, %v239
        %v241 = vperm.slane %v236, 0
        %v242 = vmul.f32 %v241, %v236
        %v243 = vsel %vm200, %v242, 0.0
        %244 = vadd.xlane.f32.xlu0 %v243
        %v245 = vpop.xlane.xlu0 %244
        %v246 = vadd.f32 %v210, %v245
        %v247 = vperm.slane %v236, 1
        %v248 = vmul.f32 %v247, %v236
        %v249 = vsel %vm200, %v248, 0.0
        %250 = vadd.xlane.f32.xlu0 %v249
        %v251 = vpop.xlane.xlu0 %250
        %v252 = vadd.f32 %v216, %v251
        %v253 = vperm.slane %v236, 2
        %v254 = vmul.f32 %v253, %v236
        %v255 = vsel %vm200, %v254, 0.0
        %256 = vadd.xlane.f32.xlu0 %v255
        %v257 = vpop.xlane.xlu0 %256
        %v258 = vadd.f32 %v222, %v257
        %v259 = vperm.slane %v236, 3
        %v260 = vmul.f32 %v259, %v236
        %v261 = vsel %vm200, %v260, 0.0
        %262 = vadd.xlane.f32.xlu0 %v261
        %v263 = vpop.xlane.xlu0 %262
        %v264 = vadd.f32 %v228, %v263
        %v265 = vsub.f32 %v233, %v236
        %v266 = vmul.f32 %v265, 0.25
        %s267 = scalar_lea.vmem %s168, 8 [#allocation2]
        %v268 = vld [vmem:[%s267] sm:$0xf]
        %v269 = vadd.f32 %v266, %v268
        %v270 = vmax.f32 %v269, 0.0
        %v271 = vmin.f32 %v270, 4.0
        %v272 = vround.ne.pseudo %v271
        %v273 = vsel %vm200, %v272, 0.0
        %274 = vadd.xlane.f32.xlu0 %v273
        %v275 = vpop.xlane.xlu0 %274
        %v276 = vadd.f32 %v240, %v275
        %v277 = vperm.slane %v272, 0
        %v278 = vmul.f32 %v277, %v272
        %v279 = vsel %vm200, %v278, 0.0
        %280 = vadd.xlane.f32.xlu0 %v279
        %v281 = vpop.xlane.xlu0 %280
        %v282 = vadd.f32 %v246, %v281
        %v283 = vperm.slane %v272, 1
        %v284 = vmul.f32 %v283, %v272
        %v285 = vsel %vm200, %v284, 0.0
        %286 = vadd.xlane.f32.xlu0 %v285
        %v287 = vpop.xlane.xlu0 %286
        %v288 = vadd.f32 %v252, %v287
        %v289 = vperm.slane %v272, 2
        %v290 = vmul.f32 %v289, %v272
        %v291 = vsel %vm200, %v290, 0.0
        %292 = vadd.xlane.f32.xlu0 %v291
        %v293 = vpop.xlane.xlu0 %292
        %v294 = vadd.f32 %v258, %v293
        %v295 = vperm.slane %v272, 3
        %v296 = vmul.f32 %v295, %v272
        %v297 = vsel %vm200, %v296, 0.0
        %298 = vadd.xlane.f32.xlu0 %v297
        %v299 = vpop.xlane.xlu0 %298
        %v300 = vadd.f32 %v264, %v299
        %v301 = vsub.f32 %v269, %v272
        %v302 = vmul.f32 %v301, 0.25
        %s303 = scalar_lea.vmem %s168, 12 [#allocation2]
        %v304 = vld [vmem:[%s303] sm:$0xf]
        %v305 = vadd.f32 %v302, %v304
        %v306 = vmax.f32 %v305, 0.0
        %v307 = vmin.f32 %v306, 4.0
        %v308 = vround.ne.pseudo %v307
        %v309 = vsel %vm200, %v308, 0.0
        %310 = vadd.xlane.f32.xlu0 %v309
        %v311 = vpop.xlane.xlu0 %310
        %v312 = vadd.f32 %v276, %v311
        %v313 = vperm.slane %v308, 0
        %v314 = vmul.f32 %v313, %v308
        %v315 = vsel %vm200, %v314, 0.0
        %316 = vadd.xlane.f32.xlu0 %v315
        %v317 = vpop.xlane.xlu0 %316
        %v318 = vadd.f32 %v282, %v317
        %v319 = vperm.slane %v308, 1
        %v320 = vmul.f32 %v319, %v308
        %v321 = vsel %vm200, %v320, 0.0
        %322 = vadd.xlane.f32.xlu0 %v321
        %v323 = vpop.xlane.xlu0 %322
        %v324 = vadd.f32 %v288, %v323
        %v325 = vperm.slane %v308, 2
        %v326 = vmul.f32 %v325, %v308
        %v327 = vsel %vm200, %v326, 0.0
        %328 = vadd.xlane.f32.xlu0 %v327
        %v329 = vpop.xlane.xlu0 %328
        %v330 = vadd.f32 %v294, %v329
        %v331 = vperm.slane %v308, 3
        %v332 = vmul.f32 %v331, %v308
        %v333 = vsel %vm200, %v332, 0.0
        %334 = vadd.xlane.f32.xlu0 %v333
        %v335 = vpop.xlane.xlu0 %334
        %v336 = vadd.f32 %v300, %v335
        %vm337 = vcmask 3072
        %338 = vst.msk [vmem:[%s195] sm:$0xf] %vm337, %v312
        %vm339 = vcmask 11272
        %340 = vst.msk [vmem:[%s195] sm:$0xf] %vm339, %v318
        %vm341 = vcmask 19472
        %342 = vst.msk [vmem:[%s195] sm:$0xf] %vm341, %v324
        %vm343 = vcmask 27672
        %344 = vst.msk [vmem:[%s195] sm:$0xf] %vm343, %v330
        %vm345 = vcmask 35872
        %346 = vst.msk [vmem:[%s195] sm:$0xf] %vm345, %v336
        %p347 = scmp.lt.s32.totalorder %s16, 1
        %s348 = scalar_select %p347, %s16, 1
        %p349 = scmp.lt.s32.totalorder %s17, 1
        %s350 = scalar_select %p349, %s17, 1
        %s351 = smul.addr %s348, 2
        %s352 = sadd.s32 %s350, %s351
        %s353 = smul.addr %s352, 4
        %s354 = scalar_lea.vmem %s1, %s353
        // Predicated region
        $region66: #{spiking_conv_layer.2} parent=60 // pred_check
          %p355 = pneg %p72
        $region67: #{spiking_conv_layer.2} parent=60 // pred_check_branch
          %357 = sbr.rel (%p355) target = $region69
        $region68: #{spiking_conv_layer.2} parent=60 // pred_region
          _
        $region69: #{spiking_conv_layer.2} parent=60 // pred_fallthru
          _
      $region61: #{spiking_conv_layer.2} parent=5 // pred_fallthru
        _
      %p358 = scmp.le.s32.totalorder 2, %s7
      // Predicated region
      $region70: #{spiking_conv_layer.2} parent=5 // pred_check
        %p359 = pneg %p358
      $region71: #{spiking_conv_layer.2} parent=5 // pred_check_branch
        %361 = sbr.rel (%p359) target = $region73
      $region72: #{spiking_conv_layer.2} parent=5 // pred_region
        %s362 = ssub.s32 %s7, 2
        // Predicated region
        $region74: #{spiking_conv_layer.2} parent=72 // pred_check
          %p363 = pneg %p78
        $region75: #{spiking_conv_layer.2} parent=72 // pred_check_branch
          %365 = sbr.rel (%p363) target = $region77
        $region76: #{spiking_conv_layer.2} parent=72 // pred_region
          %p366 = scmp.lt.s32.totalorder %s18, 1
          %s367 = scalar_select %p366, %s18, 1
          %p368 = scmp.lt.s32.totalorder %s19, 1
          %s369 = scalar_select %p368, %s19, 1
          %s370 = smul.addr %s367, 2
          %s371 = sadd.s32 %s369, %s370
          %s372 = smul.addr %s371, 4
          %s373 = scalar_lea.vmem %s1, %s372
        $region77: #{spiking_conv_layer.2} parent=72 // pred_fallthru
          _
      $region73: #{spiking_conv_layer.2} parent=5 // pred_fallthru
        _
    $region6: #{spiking_conv_layer.2} parent=1 // loop_footer
      %s11 = sadd.s32 1, %s7
    $region7: #{spiking_conv_layer.2} parent=1 // loop_footer_branch
      %6 = sbr.rel target = $region3
    $region8: #{spiking_conv_layer.2} parent=1 // loop_exit
      _

// kernel: spiking_conv_layer.3
$region0: #{spiking_conv_layer.3}
  #allocation0 [shape = 'u32[]', space=smem, size = 0x4, offset = 0x4, fixed_abs, tag = 'smem constant byte address 0x4 - core index']
  #allocation1 [shape = 'u32[72,128]{1,0:T(1,128)}', space=vmem, size = 0x9000, scoped, tag = 'internal scratch']
  %s0 = inlined_call_operand.vmem [shape: f32[4,2,4,256], index: 0, kind: input, shape index: {}]
  %s1 = inlined_call_operand.vmem [shape: f32[8,4], index: 1, kind: input, shape index: {}]
  %s2 = inlined_call_operand.vmem [shape: f32[8,1], index: 2, kind: input, shape index: {}]
  %s3 = inlined_call_operand.vmem [shape: f32[4,2,8,256], index: 3, kind: output, shape index: {}]
  %s4 = sld [smem:[#allocation0]]
  $region120: #{spiking_conv_layer.3} parent=0
    _
  %s6 = ssub.s32 1, %s4
  %s7 = scalar_select 0, %s6, %s4
  $region1: #{spiking_conv_layer.3} parent=0
    #allocation2 [shape = 'u8[16384]{0}', space=vmem, size = 0x4000, scoped, tag = 'input window, operand 0']
    #allocation3 [shape = 'u8[32768]{0}', space=vmem, size = 0x8000, scoped, tag = 'output window, operand 0']
    loop: start=0, step=1, limit=6
    $region2: #{spiking_conv_layer.3} parent=1 // loop_pre_header
      _
    $region3: #{spiking_conv_layer.3} parent=1 // loop_header
      %s9 = sphi 0, %s13
      %p10 = scmp.ge.s32.totalorder %s9, 6
      %s16 = sphi 0, %s28
      %s17 = sphi 0, %s24
      %s18 = sphi 0, %s16
      %s19 = sphi 0, %s17
      %s20 = sphi 0, %s18
      %s21 = sphi 0, %s19
      %s33 = sphi 0, %s35
      %s36 = sphi 0, %s33
      %s37 = sphi 0, %s36
      %s53 = sphi 0, %s37
      %s57 = sphi 0, %s57
      %s59 = sphi 0, %s57
      %s60 = sphi 0, %s59
      %s74 = sphi 0, %s60
      %s78 = sphi 0, %s78
      %s80 = sphi 0, %s78
      %s81 = sphi 0, %s80
      %s95 = sphi 0, %s81
      %s103 = sphi 0, %s105
      %s106 = sphi 0, %s103
      %s107 = sphi 0, %s106
      %s123 = sphi 0, %s107
    $region4: #{spiking_conv_layer.3} parent=1 // loop_header_branch
      %12 = sbr.rel (%p10) target = $region8
    $region5: #{spiking_conv_layer.3} parent=1 // loop_body
      %s14 = ssub.s32 %s9, 1
      %s15 = ssub.s32 %s9, 2
      %s22 = sadd.s32 1, %s17
      %p23 = scmp.ge.s32.totalorder %s22, 2
      %s24 = scalar_select %p23, 0, %s22
      %s25 = sadd.s32 1, %s16
      %s26 = scalar_select %p23, %s25, %s16
      %p27 = scmp.ge.s32.totalorder %s26, 2
      %s28 = scalar_select %p27, 0, %s26
      %s29 = ssub.s32 %s16, %s28
      %s30 = ssub.s32 %s17, %s24
      %s31 = sor.u32 %s29, %s30
      %p32 = scmp.eq.s32.totalorder %s31, 0
      %s34 = sadd.s32 %s33, 1
      %s35 = scalar_select %p32, %s33, %s34
      %p38 = pneg %p32
      %p39 = scmp.eq.s32.totalorder %s9, 3
      %p40 = por %p38, %p39
      %p41 = scmp.ne.s32.totalorder %s33, %s36
      %p42 = scmp.eq.s32.totalorder %s9, 0
      %p43 = por %p41, %p42
      %p44 = scmp.ne.s32.totalorder %s33, %s36
      %p45 = scmp.eq.s32.totalorder %s14, 3
      %p46 = por %p44, %p45
      %p47 = scmp.ne.s32.totalorder %s36, %s37
      %p48 = scmp.eq.s32.totalorder %s14, 0
      %p49 = por %p47, %p48
      %p50 = scmp.ne.s32.totalorder %s36, %s37
      %p51 = scmp.eq.s32.totalorder %s15, 3
      %p52 = por %p50, %p51
      %p54 = scmp.ne.s32.totalorder %s37, %s53
      %p55 = scmp.eq.s32.totalorder %s15, 0
      %p56 = por %p54, %p55
      %s58 = sadd.s32 %s57, 1
      %p61 = scmp.eq.s32.totalorder %s9, 3
      %p62 = scmp.ne.s32.totalorder %s57, %s59
      %p63 = scmp.eq.s32.totalorder %s9, 0
      %p64 = por %p62, %p63
      %p65 = scmp.ne.s32.totalorder %s57, %s59
      %p66 = scmp.eq.s32.totalorder %s14, 3
      %p67 = por %p65, %p66
      %p68 = scmp.ne.s32.totalorder %s59, %s60
      %p69 = scmp.eq.s32.totalorder %s14, 0
      %p70 = por %p68, %p69
      %p71 = scmp.ne.s32.totalorder %s59, %s60
      %p72 = scmp.eq.s32.totalorder %s15, 3
      %p73 = por %p71, %p72
      %p75 = scmp.ne.s32.totalorder %s60, %s74
      %p76 = scmp.eq.s32.totalorder %s15, 0
      %p77 = por %p75, %p76
      %s79 = sadd.s32 %s78, 1
      %p82 = scmp.eq.s32.totalorder %s9, 3
      %p83 = scmp.ne.s32.totalorder %s78, %s80
      %p84 = scmp.eq.s32.totalorder %s9, 0
      %p85 = por %p83, %p84
      %p86 = scmp.ne.s32.totalorder %s78, %s80
      %p87 = scmp.eq.s32.totalorder %s14, 3
      %p88 = por %p86, %p87
      %p89 = scmp.ne.s32.totalorder %s80, %s81
      %p90 = scmp.eq.s32.totalorder %s14, 0
      %p91 = por %p89, %p90
      %p92 = scmp.ne.s32.totalorder %s80, %s81
      %p93 = scmp.eq.s32.totalorder %s15, 3
      %p94 = por %p92, %p93
      %p96 = scmp.ne.s32.totalorder %s81, %s95
      %p97 = scmp.eq.s32.totalorder %s15, 0
      %p98 = por %p96, %p97
      %s99 = ssub.s32 %s16, %s28
      %s100 = ssub.s32 %s17, %s24
      %s101 = sor.u32 %s99, %s100
      %p102 = scmp.eq.s32.totalorder %s101, 0
      %s104 = sadd.s32 %s103, 1
      %s105 = scalar_select %p102, %s103, %s104
      %p108 = pneg %p102
      %p109 = scmp.eq.s32.totalorder %s9, 3
      %p110 = por %p108, %p109
      %p111 = scmp.ne.s32.totalorder %s103, %s106
      %p112 = scmp.eq.s32.totalorder %s9, 0
      %p113 = por %p111, %p112
      %p114 = scmp.ne.s32.totalorder %s103, %s106
      %p115 = scmp.eq.s32.totalorder %s14, 3
      %p116 = por %p114, %p115
      %p117 = scmp.ne.s32.totalorder %s106, %s107
      %p118 = scmp.eq.s32.totalorder %s14, 0
      %p119 = por %p117, %p118
      %p120 = scmp.ne.s32.totalorder %s106, %s107
      %p121 = scmp.eq.s32.totalorder %s15, 3
      %p122 = por %p120, %p121
      %p124 = scmp.ne.s32.totalorder %s107, %s123
      %p125 = scmp.eq.s32.totalorder %s15, 0
      %p126 = por %p124, %p125
      %p127 = scmp.le.s32.totalorder 1, %s9
      %p128 = scmp.lt.s32.totalorder %s9, 5
      %p129 = pnand %p127, %p128
      %p130 = pneg %p129
      // Predicated region
      $region9: #{spiking_conv_layer.3} parent=5 // pred_check
        _
      $region10: #{spiking_conv_layer.3} parent=5 // pred_check_branch
        %132 = sbr.rel (%p129) target = $region12
      $region11: #{spiking_conv_layer.3} parent=5 // pred_region
        %s133 = ssub.s32 %s9, 1
        // Predicated region
        $region13: #{spiking_conv_layer.3} parent=11 // pred_check
          %p134 = pneg %p70
        $region14: #{spiking_conv_layer.3} parent=11 // pred_check_branch
          %136 = sbr.rel (%p134) target = $region16
        $region15: #{spiking_conv_layer.3} parent=11 // pred_region
          _
        $region16: #{spiking_conv_layer.3} parent=11 // pred_fallthru
          _
        // Predicated region
        $region17: #{spiking_conv_layer.3} parent=11 // pred_check
          %p137 = pneg %p91
        $region18: #{spiking_conv_layer.3} parent=11 // pred_check_branch
          %139 = sbr.rel (%p137) target = $region20
        $region19: #{spiking_conv_layer.3} parent=11 // pred_region
          _
        $region20: #{spiking_conv_layer.3} parent=11 // pred_fallthru
          _
      $region12: #{spiking_conv_layer.3} parent=5 // pred_fallthru
        _
      %p140 = scmp.lt.s32.totalorder %s9, 4
      // Predicated region
      $region21: #{spiking_conv_layer.3} parent=5 // pred_check
        %p141 = pneg %p140
      $region22: #{spiking_conv_layer.3} parent=5 // pred_check_branch
        %143 = sbr.rel (%p141) target = $region24
      $region23: #{spiking_conv_layer.3} parent=5 // pred_region
        // Predicated region
        $region25: #{spiking_conv_layer.3} parent=23 // pred_check
          %p144 = pneg %p43
        $region26: #{spiking_conv_layer.3} parent=23 // pred_check_branch
          %146 = sbr.rel (%p144) target = $region28
        $region27: #{spiking_conv_layer.3} parent=23 // pred_region
          %s147 = sand.u32 %s33, 1
          %s148 = sand.u32 %s33, 1
          %s149 = smul.addr %s148, 16
          %s150 = scalar_lea.vmem [#allocation2], %s149
          %s151 = smul.addr %s16, 2
          %s152 = sadd.s32 %s17, %s151
          %s153 = smul.addr %s152, 4
          %s154 = scalar_lea.vmem %s0, %s153
          // Predicated region
          $region29: #{spiking_conv_layer.3} parent=27 // pred_check
            _
          $region30: #{spiking_conv_layer.3} parent=27 // pred_check_branch
            %156 = sbr.rel (0) target = $region32
          $region31: #{spiking_conv_layer.3} parent=27 // pred_region
            // Predicated region
            $region33: #{spiking_conv_layer.3} parent=31 // pred_check
              _
            $region34: #{spiking_conv_layer.3} parent=31 // pred_check_branch
              %158 = sbr.rel target = $region36
            $region35: #{spiking_conv_layer.3} parent=31 // pred_region
              // Predicated region
              $region48: #{spiking_conv_layer.3} parent=35 // pred_check
                _
              $region49: #{spiking_conv_layer.3} parent=35 // pred_check_branch
                %180 = sbr.rel (0) target = $region51
              $region50: #{spiking_conv_layer.3} parent=35 // pred_region
                loop: start=0, step=1, limit=1
                $region52: #{spiking_conv_layer.3} parent=50 // loop_pre_header
                  _
                $region53: #{spiking_conv_layer.3} parent=50 // loop_header
                  %s182 = sphi 0, %s186
                  %p183 = scmp.ge.s32.totalorder %s182, 1
                  %s187 = sphi %s154, %s154
                  %s188 = sphi %s150, %s150
                $region54: #{spiking_conv_layer.3} parent=50 // loop_header_branch
                  %185 = sbr.rel (%p183) target = $region58
                $region55: #{spiking_conv_layer.3} parent=50 // loop_body
                  _
                $region56: #{spiking_conv_layer.3} parent=50 // loop_footer
                  %s186 = sadd.s32 1, %s182
                $region57: #{spiking_conv_layer.3} parent=50 // loop_footer_branch
                  %181 = sbr.rel target = $region53
                $region58: #{spiking_conv_layer.3} parent=50 // loop_exit
                  _
                %s190 = ssub.s32 16, 1
                loop: start=0, step=1, limit=1
                $region59: #{spiking_conv_layer.3} parent=50 // loop_pre_header
                  _
                $region60: #{spiking_conv_layer.3} parent=50 // loop_header
                  %s192 = sphi 0, %s196
                  %p193 = scmp.ge.s32.totalorder %s192, 1
                  %s197 = sphi %s154, %s154
                  %s198 = sphi %s150, %s150
                $region61: #{spiking_conv_layer.3} parent=50 // loop_header_branch
                  %195 = sbr.rel (%p193) target = $region65
                $region62: #{spiking_conv_layer.3} parent=50 // loop_body
                  %v199 = vld [vmem:[%s197] sm:%s190]
                  %200 = vst [vmem:[%s198] sm:%s190] %v199
                  %v201 = vld [vmem:[%s197 + $0x10] sm:%s190]
                  %202 = vst [vmem:[%s198 + $0x4] sm:%s190] %v201
                  %v203 = vld [vmem:[%s197 + $0x20] sm:%s190]
                  %204 = vst [vmem:[%s198 + $0x8] sm:%s190] %v203
                  %v205 = vld [vmem:[%s197 + $0x30] sm:%s190]
                  %206 = vst [vmem:[%s198 + $0xc] sm:%s190] %v205
                $region63: #{spiking_conv_layer.3} parent=50 // loop_footer
                  %s196 = sadd.s32 1, %s192
                $region64: #{spiking_conv_layer.3} parent=50 // loop_footer_branch
                  %191 = sbr.rel target = $region60
                $region65: #{spiking_conv_layer.3} parent=50 // loop_exit
                  _
              $region51: #{spiking_conv_layer.3} parent=35 // pred_fallthru
                _
            $region36: #{spiking_conv_layer.3} parent=31 // pred_fallthru
              _
            // Predicated region
            $region37: #{spiking_conv_layer.3} parent=31 // pred_check
              _
            $region38: #{spiking_conv_layer.3} parent=31 // pred_check_branch
              %160 = sbr.rel (0) target = $region40
            $region39: #{spiking_conv_layer.3} parent=31 // pred_region
              %s162 = ssub.s32 16, 1
              loop: start=0, step=1, limit=1
              $region41: #{spiking_conv_layer.3} parent=39 // loop_pre_header
                _
              $region42: #{spiking_conv_layer.3} parent=39 // loop_header
                %s164 = sphi 0, %s168
                %p165 = scmp.ge.s32.totalorder %s164, 1
                %s169 = sphi %s154, %s154
                %s170 = sphi %s150, %s150
              $region43: #{spiking_conv_layer.3} parent=39 // loop_header_branch
                %167 = sbr.rel (%p165) target = $region47
              $region44: #{spiking_conv_layer.3} parent=39 // loop_body
                %v171 = vld [vmem:[%s169] sm:%s162]
                %172 = vst [vmem:[%s170] sm:%s162] %v171
                %v173 = vld [vmem:[%s169 + $0x10] sm:%s162]
                %174 = vst [vmem:[%s170 + $0x4] sm:%s162] %v173
                %v175 = vld [vmem:[%s169 + $0x20] sm:%s162]
                %176 = vst [vmem:[%s170 + $0x8] sm:%s162] %v175
                %v177 = vld [vmem:[%s169 + $0x30] sm:%s162]
                %178 = vst [vmem:[%s170 + $0xc] sm:%s162] %v177
              $region45: #{spiking_conv_layer.3} parent=39 // loop_footer
                %s168 = sadd.s32 1, %s164
              $region46: #{spiking_conv_layer.3} parent=39 // loop_footer_branch
                %163 = sbr.rel target = $region42
              $region47: #{spiking_conv_layer.3} parent=39 // loop_exit
                _
            $region40: #{spiking_conv_layer.3} parent=31 // pred_fallthru
              _
          $region32: #{spiking_conv_layer.3} parent=27 // pred_fallthru
            _
          %207 = vnop
        $region28: #{spiking_conv_layer.3} parent=23 // pred_fallthru
          _
      $region24: #{spiking_conv_layer.3} parent=5 // pred_fallthru
        _
      %p208 = scmp.le.s32.totalorder 1, %s9
      %p209 = scmp.lt.s32.totalorder %s9, 5
      %p210 = pnand %p208, %p209
      %p211 = pneg %p210
      // Predicated region
      $region66: #{spiking_conv_layer.3} parent=5 // pred_check
        _
      $region67: #{spiking_conv_layer.3} parent=5 // pred_check_branch
        %213 = sbr.rel (%p210) target = $region69
      $region68: #{spiking_conv_layer.3} parent=5 // pred_region
        %s214 = ssub.s32 %s9, 1
        %s215 = sand.u32 %s36, 1
        %s216 = sand.u32 %s36, 1
        %s217 = smul.addr %s216, 16
        %s218 = scalar_lea.vmem [#allocation2], %s217
        // Predicated region
        $region70: #{spiking_conv_layer.3} parent=68 // pred_check
          %p219 = pneg %p49
        $region71: #{spiking_conv_layer.3} parent=68 // pred_check_branch
          %221 = sbr.rel (%p219) target = $region73
        $region72: #{spiking_conv_layer.3} parent=68 // pred_region
          _
        $region73: #{spiking_conv_layer.3} parent=68 // pred_fallthru
          _
        %s222 = sand.u32 %s36, 1
        %s223 = sand.u32 %s36, 1
        %s224 = smul.addr %s223, 16
        %s225 = scalar_lea.vmem [#allocation2], %s224
        %p226 = pneg %p49
        %p227 = pneg %p46
        %p228 = pneg %p70
        %p229 = pneg %p67
        %p230 = pneg %p91
        %p231 = pneg %p88
        %p232 = pneg %p119
        %p233 = pneg %p116
        %s234 = sand.u32 %s106, 1
        %s235 = sand.u32 %s106, 1
        %s236 = smul.addr %s235, 32
        %s237 = scalar_lea.vmem [#allocation3], %s236
        %v238 = vld [vmem:[%s1] sm:$0xff]
        %v239 = vld [vmem:[%s2] sm:$0xff]
        %v240 = vld [vmem:[%s218] sm:$0xf]
        %v241 = vmax.f32 %v240, 0.0
        %v242 = vmin.f32 %v241, 4.0
        %v243 = vround.ne.pseudo %v242
        %245 = vset.pattern.permute.xlu0 0
        %246 = vperm.xlu0 %245, %v238
        %v247 = vpop.permute.xlu0 %246
        %v249 = vperm.slane %v243, 0
        %v250 = vmul.f32 %v247, %v249
        %251 = vset.pattern.permute.xlu0 1
        %252 = vperm.xlu0 %251, %v238
        %v253 = vpop.permute.xlu0 %252
        %v255 = vperm.slane %v243, 1
        %v256 = vmul.f32 %v253, %v255
        %v257 = vadd.f32 %v250, %v256
        %258 = vset.pattern.permute.xlu0 2
        %259 = vperm.xlu0 %258, %v238
        %v260 = vpop.permute.xlu0 %259
        %v262 = vperm.slane %v243, 2
        %v263 = vmul.f32 %v260, %v262
        %v264 = vadd.f32 %v257, %v263
        %265 = vset.pattern.permute.xlu0 3
        %266 = vperm.xlu0 %265, %v238
        %v267 = vpop.permute.xlu0 %266
        %v269 = vperm.slane %v243, 3
        %v270 = vmul.f32 %v267, %v269
        %v271 = vadd.f32 %v264, %v270
        %273 = vset.pattern.permute.xlu0 0
        %274 = vperm.xlu0 %273, %v239
        %v275 = vpop.permute.xlu0 %274
        %v277 = vadd.f32 %v271, %v275
        %278 = vst [vmem:[%s237] sm:$0xff] %v277
        %v279 = vsub.f32 %v240, %v243
        %v280 = vmul.f32 %v279, 0.25
        %s281 = scalar_lea.vmem %s218, 4 [#allocation2]
        %v282 = vld [vmem:[%s281] sm:$0xf]
        %v283 = vadd.f32 %v280, %v282
        %v284 = vmax.f32 %v283, 0.0
        %v285 = vmin.f32 %v284, 4.0
        %v286 = vround.ne.pseudo %v285
        %v287 = vperm.slane %v286, 0
        %v288 = vmul.f32 %v247, %v287
        %v289 = vperm.slane %v286, 1
        %v290 = vmul.f32 %v253, %v289
        %v291 = vadd.f32 %v288, %v290
        %v292 = vperm.slane %v286, 2
        %v293 = vmul.f32 %v260, %v292
        %v294 = vadd.f32 %v291, %v293
        %v295 = vperm.slane %v286, 3
        %v296 = vmul.f32 %v267, %v295
        %v297 = vadd.f32 %v294, %v296
        %v298 = vadd.f32 %v297, %v275
        %s299 = scalar_lea.vmem %s237, 8 [#allocation3]
        %300 = vst [vmem:[%s299] sm:$0xff] %v298
        %v301 = vsub.f32 %v283, %v286
        %v302 = vmul.f32 %v301, 0.25
        %s303 = scalar_lea.vmem %s218, 8 [#allocation2]
        %v304 = vld [vmem:[%s303] sm:$0xf]
        %v305 = vadd.f32 %v302, %v304
        %v306 = vmax.f32 %v305, 0.0
        %v307 = vmin.f32 %v306, 4.0
        %v308 = vround.ne.pseudo %v307
        %v309 = vperm.slane %v308, 0
        %v310 = vmul.f32 %v247, %v309
        %v311 = vperm.slane %v308, 1
        %v312 = vmul.f32 %v253, %v311
        %v313 = vadd.f32 %v310, %v312
        %v314 = vperm.slane %v308, 2
        %v315 = vmul.f32 %v260, %v314
        %v316 = vadd.f32 %v313, %v315
        %v317 = vperm.slane %v308, 3
        %v318 = vmul.f32 %v267, %v317
        %v319 = vadd.f32 %v316, %v318
        %v320 = vadd.f32 %v319, %v275
        %s321 = scalar_lea.vmem %s237, 16 [#allocation3]
        %322 = vst [vmem:[%s321] sm:$0xff] %v320
        %v323 = vsub.f32 %v305, %v308
        %v324 = vmul.f32 %v323, 0.25
        %s325 = scalar_lea.vmem %s218, 12 [#allocation2]
        %v326 = vld [vmem:[%s325] sm:$0xf]
        %v327 = vadd.f32 %v324, %v326
        %v328 = vmax.f32 %v327, 0.0
        %v329 = vmin.f32 %v328, 4.0
        %v330 = vround.ne.pseudo %v329
        %v331 = vperm.slane %v330, 0
        %v332 = vmul.f32 %v247, %v331
        %v333 = vperm.slane %v330, 1
        %v334 = vmul.f32 %v253, %v333
        %v335 = vadd.f32 %v332, %v334
        %v336 = vperm.slane %v330, 2
        %v337 = vmul.f32 %v260, %v336
        %v338 = vadd.f32 %v335, %v337
        %v339 = vperm.slane %v330, 3
        %v340 = vmul.f32 %v267, %v339
        %v341 = vadd.f32 %v338, %v340
        %v342 = vadd.f32 %v341, %v275
        %s343 = scalar_lea.vmem %s237, 24 [#allocation3]
        %344 = vst [vmem:[%s343] sm:$0xff] %v342
        %s345 = sand.u32 %s106, 1
        %s346 = sand.u32 %s106, 1
        %s347 = smul.addr %s346, 32
        %s348 = scalar_lea.vmem [#allocation3], %s347
        // Predicated region
        $region74: #{spiking_conv_layer.3} parent=68 // pred_check
          %p349 = pneg %p116
        $region75: #{spiking_conv_layer.3} parent=68 // pred_check_branch
          %351 = sbr.rel (%p349) target = $region77
        $region76: #{spiking_conv_layer.3} parent=68 // pred_region
          %s352 = smul.addr %s18, 2
          %s353 = sadd.s32 %s19, %s352
          %s354 = smul.addr %s353, 8
          %s355 = scalar_lea.vmem %s3, %s354
          // Predicated region
          $region78: #{spiking_conv_layer.3} parent=76 // pred_check
            _
          $region79: #{spiking_conv_layer.3} parent=76 // pred_check_branch
            %357 = sbr.rel (0) target = $region81
          $region80: #{spiking_conv_layer.3} parent=76 // pred_region
            // Predicated region
            $region82: #{spiking_conv_layer.3} parent=80 // pred_check
              _
            $region83: #{spiking_conv_layer.3} parent=80 // pred_check_branch
              %359 = sbr.rel (0) target = $region85
            $region84: #{spiking_conv_layer.3} parent=80 // pred_region
              // Predicated region
              $region97: #{spiking_conv_layer.3} parent=84 // pred_check
                _
              $region98: #{spiking_conv_layer.3} parent=84 // pred_check_branch
                %381 = sbr.rel (0) target = $region100
              $region99: #{spiking_conv_layer.3} parent=84 // pred_region
                loop: start=0, step=1, limit=1
                $region101: #{spiking_conv_layer.3} parent=99 // loop_pre_header
                  _
                $region102: #{spiking_conv_layer.3} parent=99 // loop_header
                  %s383 = sphi 0, %s387
                  %p384 = scmp.ge.s32.totalorder %s383, 1
                  %s388 = sphi %s348, %s348
                  %s389 = sphi %s355, %s355
                $region103: #{spiking_conv_layer.3} parent=99 // loop_header_branch
                  %386 = sbr.rel (%p384) target = $region107
                $region104: #{spiking_conv_layer.3} parent=99 // loop_body
                  %v390 = vld [vmem:[%s388] sm:$0xff]
                  %391 = vst [vmem:[%s389] sm:$0xff] %v390
                  %v392 = vld [vmem:[%s388 + $0x8] sm:$0xff]
                  %393 = vst [vmem:[%s389 + $0x20] sm:$0xff] %v392
                  %v394 = vld [vmem:[%s388 + $0x10] sm:$0xff]
                  %395 = vst [vmem:[%s389 + $0x40] sm:$0xff] %v394
                  %v396 = vld [vmem:[%s388 + $0x18] sm:$0xff]
                  %397 = vst [vmem:[%s389 + $0x60] sm:$0xff] %v396
                $region105: #{spiking_conv_layer.3} parent=99 // loop_footer
                  %s387 = sadd.s32 1, %s383
                $region106: #{spiking_conv_layer.3} parent=99 // loop_footer_branch
                  %382 = sbr.rel target = $region102
                $region107: #{spiking_conv_layer.3} parent=99 // loop_exit
                  _
              $region100: #{spiking_conv_layer.3} parent=84 // pred_fallthru
                _
              // Predicated region
              $region108: #{spiking_conv_layer.3} parent=84 // pred_check
                _
              $region109: #{spiking_conv_layer.3} parent=84 // pred_check_branch
                %399 = sbr.rel target = $region111
              $region110: #{spiking_conv_layer.3} parent=84 // pred_region
                _
              $region111: #{spiking_conv_layer.3} parent=84 // pred_fallthru
                _
            $region85: #{spiking_conv_layer.3} parent=80 // pred_fallthru
              _
            // Predicated region
            $region86: #{spiking_conv_layer.3} parent=80 // pred_check
              _
            $region87: #{spiking_conv_layer.3} parent=80 // pred_check_branch
              %361 = sbr.rel target = $region89
            $region88: #{spiking_conv_layer.3} parent=80 // pred_region
              %s363 = ssub.s32 256, 1
              loop: start=0, step=1, limit=1
              $region90: #{spiking_conv_layer.3} parent=88 // loop_pre_header
                _
              $region91: #{spiking_conv_layer.3} parent=88 // loop_header
                %s365 = sphi 0, %s369
                %p366 = scmp.ge.s32.totalorder %s365, 1
                %s370 = sphi %s348, %s348
                %s371 = sphi %s355, %s355
              $region92: #{spiking_conv_layer.3} parent=88 // loop_header_branch
                %368 = sbr.rel (%p366) target = $region96
              $region93: #{spiking_conv_layer.3} parent=88 // loop_body
                %v372 = vld [vmem:[%s370] sm:%s363]
                %373 = vst [vmem:[%s371] sm:%s363] %v372
                %v374 = vld [vmem:[%s370 + $0x8] sm:%s363]
                %375 = vst [vmem:[%s371 + $0x20] sm:%s363] %v374
                %v376 = vld [vmem:[%s370 + $0x10] sm:%s363]
                %377 = vst [vmem:[%s371 + $0x40] sm:%s363] %v376
                %v378 = vld [vmem:[%s370 + $0x18] sm:%s363]
                %379 = vst [vmem:[%s371 + $0x60] sm:%s363] %v378
              $region94: #{spiking_conv_layer.3} parent=88 // loop_footer
                %s369 = sadd.s32 1, %s365
              $region95: #{spiking_conv_layer.3} parent=88 // loop_footer_branch
                %364 = sbr.rel target = $region91
              $region96: #{spiking_conv_layer.3} parent=88 // loop_exit
                _
            $region89: #{spiking_conv_layer.3} parent=80 // pred_fallthru
              _
          $region81: #{spiking_conv_layer.3} parent=76 // pred_fallthru
            _
          %400 = vnop
        $region77: #{spiking_conv_layer.3} parent=68 // pred_fallthru
          _
      $region69: #{spiking_conv_layer.3} parent=5 // pred_fallthru
        _
      %p401 = scmp.le.s32.totalorder 2, %s9
      // Predicated region
      $region112: #{spiking_conv_layer.3} parent=5 // pred_check
        %p402 = pneg %p401
      $region113: #{spiking_conv_layer.3} parent=5 // pred_check_branch
        %404 = sbr.rel (%p402) target = $region115
      $region114: #{spiking_conv_layer.3} parent=5 // pred_region
        %s405 = ssub.s32 %s9, 2
        // Predicated region
        $region116: #{spiking_conv_layer.3} parent=114 // pred_check
          %p406 = pneg %p122
        $region117: #{spiking_conv_layer.3} parent=114 // pred_check_branch
          %408 = sbr.rel (%p406) target = $region119
        $region118: #{spiking_conv_layer.3} parent=114 // pred_region
          %s409 = sand.u32 %s107, 1
          %s410 = sand.u32 %s107, 1
          %s411 = smul.addr %s410, 32
          %s412 = scalar_lea.vmem [#allocation3], %s411
        $region119: #{spiking_conv_layer.3} parent=114 // pred_fallthru
          _
      $region115: #{spiking_conv_layer.3} parent=5 // pred_fallthru
        _
    $region6: #{spiking_conv_layer.3} parent=1 // loop_footer
      %s13 = sadd.s32 1, %s9
    $region7: #{spiking_conv_layer.3} parent=1 // loop_footer_branch
      %8 = sbr.rel target = $region3
    $region8: #{spiking_conv_layer.3} parent=1 // loop_exit
      _

</llo_original>
